<compile_context>
chip_gen: v7x
topology: tpu7x:2x2x1
jax: 0.10.0
libtpu: 0.0.40
codegen_flags: <defaults>
</compile_context>

<pallas_src>
import functools

import jax
import jax.numpy as jnp
from jax.experimental import pallas as pl
from jax.experimental.pallas import tpu as pltpu


def _spatial_attention_kernel(x_ref, w1_ref, b1_ref, w2_ref, b2b_ref, wsp_ref,
                              o_ref, *, inv_len):
    TB, C, L = x_ref.shape

    # Small per-step constants, loaded/hoisted once (outside the batch loop so
    # the broadcasts are not re-emitted every iteration).
    wsp = wsp_ref[...]                       # (C, 3) depthwise taps
    w_m1 = wsp[:, 0:1]                       # (C, 1)
    w_0 = wsp[:, 1:2]
    w_p1 = wsp[:, 2:3]
    w1 = w1_ref[...]                         # (Cr, C)   conv1.weight
    b1 = b1_ref[...]                         # (Cr, 1)   conv1.bias
    w2 = w2_ref[...]                         # (C, Cr)   conv2.weight
    b2b = b2b_ref[...]                       # (C, 1)    conv2.bias + spatial_conv.bias
    lane = jax.lax.broadcasted_iota(jnp.int32, (1, L), 1)

    # One batch element per iteration: bounds vreg live ranges (the elementwise
    # section keeps ~4 (C, L) values live) so pushing TB up to fill VMEM does
    # not introduce f32 spill traffic competing with the output store.
    def body(i, carry):
        x = x_ref[i]                                            # (C, L)

        # ---- squeeze: adaptive_avg_pool1d(x, 1); exact mean over the true L
        #      (wrapper zero-pads L, so the sum is unaffected by padding)
        mean = jnp.sum(x, axis=1, keepdims=True) * inv_len      # (C, 1)

        # ---- excite: 1x1 conv bottleneck.  Tiny MXU matvecs with weights in
        #      native PyTorch layout -> no transposes / relayouts needed and the
        #      (C, 1) result broadcasts directly over lanes below.
        h = jnp.maximum(
            jnp.dot(w1, mean, preferred_element_type=jnp.float32) + b1, 0.0)   # (Cr, 1)
        ctx = jnp.dot(w2, h, preferred_element_type=jnp.float32) + b2b         # (C, 1)

        # ---- depthwise conv1d, kernel_size=3, padding=1, groups=C, built from
        #      XLU lane rolls with zero-padded edges (spatial bias folded into
        #      ctx above -> one fewer full-tile VALU add)
        x_lm1 = jnp.where(lane > 0, pltpu.roll(x, shift=1, axis=1), 0.0)
        x_lp1 = jnp.where(lane < L - 1, pltpu.roll(x, shift=L - 1, axis=1), 0.0)
        g = w_m1 * x_lm1 + w_0 * x + w_p1 * x_lp1 + ctx          # (C, L)

        # ---- sigmoid gate kept on the EUP: exp + approximate reciprocal
        att = pl.reciprocal(1.0 + jnp.exp(-g), approx=True)
        o_ref[i] = (x * att).astype(o_ref.dtype)
        return carry

    jax.lax.fori_loop(0, TB, body, 0, unroll=True)


def _chip_info():
    """Returns (vmem_limit_bytes, prefer_even_grid) for the local TPU generation."""
    kind = ""
    try:
        kind = jax.devices()[0].device_kind.lower()
    except Exception:
        pass
    if "v7" in kind:
        # 64 MiB physical VMEM per TensorCore: keep a 32 MiB scoped limit and
        # prefer an even step count so both TCs get balanced halves.
        return 32 * 1024 * 1024, True
    if "v6" in kind or "trillium" in kind:
        # 128 MiB physical VMEM, single TC: be generous, run in as few steps
        # as possible.
        return 64 * 1024 * 1024, False
    # v5e / unknown: 32 MiB scoped (default is 16 MiB on v5e), single TC.
    return 32 * 1024 * 1024, False


def _choose_batch_tile(B, C, Lp, itemsize, vmem_limit_bytes, prefer_even_grid):
    """Largest divisor of B whose tiles (double-buffered in + out, plus the
    ~5 chunk-sized in-kernel temporaries) fit the scoped VMEM limit.  On
    single-TC chips this collapses to TB=B (grid of 1 step); on v7x it prefers
    an even number of 'parallel' steps so both TensorCores stay busy."""
    tile_b = C * Lp * itemsize                          # one (1, C, Lp) slab
    # 4*TB slabs for double-buffered input+output, ~6 slabs of headroom for the
    # per-batch temporaries / spill margin inside the body.
    budget = max(vmem_limit_bytes - 6 * tile_b, 4 * tile_b)
    max_tb = max(1, budget // (4 * tile_b))
    divisors = [d for d in range(1, B + 1) if B % d == 0 and d <= max_tb]
    if not divisors:
        # TODO(synk): a single (1, C, Lp) tile exceeds the VMEM budget here;
        # this case needs L-tiling with a 1-element halo for the depthwise conv.
        return 1
    if prefer_even_grid and B > 1:
        even = [d for d in divisors if (B // d) % 2 == 0]
        if even:
            return max(even)
    return max(divisors)


def spatial_attention(x, w1, b1, w2, b2, wsp, bsp):
    """x: (B, C, L); params in PyTorch Conv1d shapes (kernel dim squeezed):
       w1 (Cr, C), b1 (Cr, 1), w2 (C, Cr), b2 (C, 1), wsp (C, 3), bsp (C, 1)."""
    B, C, L = x.shape
    Cr = w1.shape[0]

    # Keep the lane dimension a multiple of 128 (lane-dense, unmasked stores).
    # Zero padding keeps the mean (scaled by the true 1/L) and the zero-padded
    # k=3 depthwise conv exact; padded columns are sliced off afterwards.
    Lp = ((L + 127) // 128) * 128
    x_in = jnp.pad(x, ((0, 0), (0, 0), (0, Lp - L))) if Lp != L else x

    # Fold the depthwise-conv bias into the context bias (both are per-channel
    # constants broadcast over L), removing a full-tile add from the kernel.
    b2b = b2 + bsp                                      # (C, 1)

    vmem_limit, prefer_even = _chip_info()
    TB = _choose_batch_tile(B, C, Lp, x.dtype.itemsize, vmem_limit, prefer_even)
    grid = (B // TB,)

    kernel = functools.partial(_spatial_attention_kernel, inv_len=1.0 / L)
    full = lambda shape: pl.BlockSpec(shape, lambda b: (0,) * len(shape))

    out = pl.pallas_call(
        kernel,
        out_shape=jax.ShapeDtypeStruct((B, C, Lp), x.dtype),
        grid_spec=pltpu.PrefetchScalarGridSpec(
            num_scalar_prefetch=0,
            grid=grid,
            in_specs=[
                pl.BlockSpec((TB, C, Lp), lambda b: (b, 0, 0)),  # x tile
                full((Cr, C)),                                   # conv1.weight
                full((Cr, 1)),                                   # conv1.bias
                full((C, Cr)),                                   # conv2.weight
                full((C, 1)),                                    # conv2.bias + spatial bias
                full((C, 3)),                                    # depthwise conv weight
            ],
            out_specs=pl.BlockSpec((TB, C, Lp), lambda b: (b, 0, 0)),
        ),
        compiler_params=pltpu.CompilerParams(
            dimension_semantics=("parallel",),
            vmem_limit_bytes=vmem_limit),
    )(x_in, w1, b1, w2, b2b, wsp)

    return out[:, :, :L] if Lp != L else out


def reference(x, w1, b1, w2, b2, wsp, bsp):
    # Pure-JAX reference mirroring the PyTorch forward.
    mean = jnp.mean(x, axis=2, keepdims=True)                      # (B, C, 1)
    h = jnp.maximum(jnp.einsum('rc,bcl->brl', w1, mean) + b1[None], 0.0)
    ctx = jnp.einsum('cr,brl->bcl', w2, h) + b2[None]              # (B, C, 1)
    xp = jnp.pad(x, ((0, 0), (0, 0), (1, 1)))
    spatial = (wsp[None, :, 0:1] * xp[:, :, :-2]
               + wsp[None, :, 1:2] * xp[:, :, 1:-1]
               + wsp[None, :, 2:3] * xp[:, :, 2:]
               + bsp[None])
    return x * jax.nn.sigmoid(ctx + spatial)


if __name__ == "__main__":
    # Matches AcousticNN's SpatialAttention(64): channels=64, reduction_ratio=8.
    B, C, L = 4, 64, 256
    reduction_ratio = 8
    Cr = C // reduction_ratio

    key = jax.random.PRNGKey(0)
    kx, k1, k2, k3, k4, k5, k6 = jax.random.split(key, 7)

    x = jax.random.normal(kx, (B, C, L), dtype=jnp.float32)

    # Shapes match the PyTorch Conv1d weights with trailing kernel dim squeezed.
    w1 = jax.random.normal(k1, (Cr, C), dtype=jnp.float32) * 0.1   # conv1.weight (Cr, C, 1)
    b1 = jax.random.normal(k2, (Cr, 1), dtype=jnp.float32) * 0.1   # conv1.bias
    w2 = jax.random.normal(k3, (C, Cr), dtype=jnp.float32) * 0.1   # conv2.weight (C, Cr, 1)
    b2 = jax.random.normal(k4, (C, 1), dtype=jnp.float32) * 0.1    # conv2.bias
    wsp = jax.random.normal(k5, (C, 3), dtype=jnp.float32) * 0.1   # spatial_conv.weight (C, 1, 3)
    bsp = jax.random.normal(k6, (C, 1), dtype=jnp.float32) * 0.1   # spatial_conv.bias

    out = spatial_attention(x, w1, b1, w2, b2, wsp, bsp)
    out = jax.block_until_ready(out)

    ref = reference(x, w1, b1, w2, b2, wsp, bsp)
    assert out.shape == (B, C, L)
    # Tolerance accounts for the EUP approximate reciprocal in the sigmoid gate.
    assert jnp.allclose(out, ref, atol=5e-3, rtol=5e-3), "mismatch vs reference"

    print("KERNEL_OK")
</pallas_src>

<mosaic_0001>
module attributes {stable_mosaic.version = 11 : i64} {
  func.func @_spatial_attention_kernel(%arg0: i32, %arg1: memref<4x64x256xf32, #tpu.memory_space<vmem>>, %arg2: memref<8x64xf32, #tpu.memory_space<vmem>>, %arg3: memref<8x1xf32, #tpu.memory_space<vmem>>, %arg4: memref<64x8xf32, #tpu.memory_space<vmem>>, %arg5: memref<64x1xf32, #tpu.memory_space<vmem>>, %arg6: memref<64x3xf32, #tpu.memory_space<vmem>>, %arg7: memref<4x64x256xf32, #tpu.memory_space<vmem>>) attributes {dimension_semantics = [#tpu.dimension_semantics<parallel>], iteration_bounds = array<i64: 1>, scalar_prefetch = 0 : i64, scratch_operands = 0 : i64, tpu.core_type = #tpu.core_type<tc>, window_params = [{transform_indices = @transform_0, window_bounds = array<i64: 4, 64, 256>}, {pipeline_mode = #tpu.pipeline_mode<synchronous>, transform_indices = @transform_1, window_bounds = array<i64: 8, 64>}, {pipeline_mode = #tpu.pipeline_mode<synchronous>, transform_indices = @transform_2, window_bounds = array<i64: 8, 1>}, {pipeline_mode = #tpu.pipeline_mode<synchronous>, transform_indices = @transform_3, window_bounds = array<i64: 64, 8>}, {pipeline_mode = #tpu.pipeline_mode<synchronous>, transform_indices = @transform_4, window_bounds = array<i64: 64, 1>}, {pipeline_mode = #tpu.pipeline_mode<synchronous>, transform_indices = @transform_5, window_bounds = array<i64: 64, 3>}, {transform_indices = @transform_6, window_bounds = array<i64: 4, 64, 256>}]} {
    %c0 = arith.constant 0 : index
    %c0_0 = arith.constant 0 : index
    %0 = vector.load %arg6[%c0, %c0_0] : memref<64x3xf32, #tpu.memory_space<vmem>>, vector<64x3xf32>
    %1 = vector.extract_strided_slice %0 {offsets = [0, 0], sizes = [64, 1], strides = [1, 1]} : vector<64x3xf32> to vector<64x1xf32>
    %2 = vector.extract_strided_slice %0 {offsets = [0, 1], sizes = [64, 1], strides = [1, 1]} : vector<64x3xf32> to vector<64x1xf32>
    %3 = vector.extract_strided_slice %0 {offsets = [0, 2], sizes = [64, 1], strides = [1, 1]} : vector<64x3xf32> to vector<64x1xf32>
    %c0_1 = arith.constant 0 : index
    %c0_2 = arith.constant 0 : index
    %4 = vector.load %arg2[%c0_1, %c0_2] : memref<8x64xf32, #tpu.memory_space<vmem>>, vector<8x64xf32>
    %c0_3 = arith.constant 0 : index
    %c0_4 = arith.constant 0 : index
    %5 = vector.load %arg3[%c0_3, %c0_4] : memref<8x1xf32, #tpu.memory_space<vmem>>, vector<8x1xf32>
    %c0_5 = arith.constant 0 : index
    %c0_6 = arith.constant 0 : index
    %6 = vector.load %arg4[%c0_5, %c0_6] : memref<64x8xf32, #tpu.memory_space<vmem>>, vector<64x8xf32>
    %c0_7 = arith.constant 0 : index
    %c0_8 = arith.constant 0 : index
    %7 = vector.load %arg5[%c0_7, %c0_8] : memref<64x1xf32, #tpu.memory_space<vmem>>, vector<64x1xf32>
    %8 = tpu.iota {dimensions = array<i32: 1>} : vector<1x256xi32>
    %c0_i32 = arith.constant 0 : i32
    %9 = arith.index_cast %c0_i32 : i32 to index
    %c0_9 = arith.constant 0 : index
    %c0_10 = arith.constant 0 : index
    %10 = vector.load %arg1[%9, %c0_9, %c0_10] : memref<4x64x256xf32, #tpu.memory_space<vmem>>, vector<1x64x256xf32>
    %11 = vector.shape_cast %10 : vector<1x64x256xf32> to vector<64x256xf32>
    %cst = arith.constant dense<0.000000e+00> : vector<64xf32>
    %12 = vector.multi_reduction <add>, %11, %cst [1] : vector<64x256xf32> to vector<64xf32>
    %13 = vector.shape_cast %12 : vector<64xf32> to vector<64x1xf32>
    %cst_11 = arith.constant 3.906250e-03 : f32
    %14 = vector.broadcast %cst_11 : f32 to vector<64x1xf32>
    %15 = arith.mulf %13, %14 : vector<64x1xf32>
    %cst_12 = arith.constant dense<0.000000e+00> : vector<8x1xf32>
    %16 = tpu.matmul %4, %15, %cst_12 {dimension_numbers = #tpu.dot_dimension_numbers<[1], [0], [0], [1], [0, 0, 1, 1], [], []>} : vector<8x64xf32>, vector<64x1xf32>, vector<8x1xf32> -> vector<8x1xf32>
    %17 = arith.addf %16, %5 : vector<8x1xf32>
    %cst_13 = arith.constant 0.000000e+00 : f32
    %18 = vector.broadcast %cst_13 : f32 to vector<8x1xf32>
    %19 = arith.maximumf %17, %18 : vector<8x1xf32>
    %cst_14 = arith.constant dense<0.000000e+00> : vector<64x1xf32>
    %20 = tpu.matmul %6, %19, %cst_14 {dimension_numbers = #tpu.dot_dimension_numbers<[1], [0], [0], [1], [0, 0, 1, 1], [], []>} : vector<64x8xf32>, vector<8x1xf32>, vector<64x1xf32> -> vector<64x1xf32>
    %21 = arith.addf %20, %7 : vector<64x1xf32>
    %c0_i32_15 = arith.constant 0 : i32
    %22 = vector.broadcast %c0_i32_15 : i32 to vector<1x256xi32>
    %23 = arith.cmpi sgt, %8, %22 : vector<1x256xi32>
    %c1_i32 = arith.constant 1 : i32
    %24 = tpu.dynamic_rotate %11 by %c1_i32 dim 1 : vector<64x256xf32>, i32 -> vector<64x256xf32>
    %cst_16 = arith.constant 0.000000e+00 : f32
    %25 = vector.shape_cast %23 : vector<1x256xi1> to vector<1x256xi1>
    %26 = vector.broadcast %25 : vector<1x256xi1> to vector<64x256xi1>
    %27 = vector.broadcast %cst_16 : f32 to vector<64x256xf32>
    %28 = arith.select %26, %24, %27 : vector<64x256xi1>, vector<64x256xf32>
    %c255_i32 = arith.constant 255 : i32
    %29 = vector.broadcast %c255_i32 : i32 to vector<1x256xi32>
    %30 = arith.cmpi slt, %8, %29 : vector<1x256xi32>
    %c255_i32_17 = arith.constant 255 : i32
    %31 = tpu.dynamic_rotate %11 by %c255_i32_17 dim 1 : vector<64x256xf32>, i32 -> vector<64x256xf32>
    %cst_18 = arith.constant 0.000000e+00 : f32
    %32 = vector.shape_cast %30 : vector<1x256xi1> to vector<1x256xi1>
    %33 = vector.broadcast %32 : vector<1x256xi1> to vector<64x256xi1>
    %34 = vector.broadcast %cst_18 : f32 to vector<64x256xf32>
    %35 = arith.select %33, %31, %34 : vector<64x256xi1>, vector<64x256xf32>
    %36 = vector.broadcast %1 : vector<64x1xf32> to vector<64x256xf32>
    %37 = arith.mulf %36, %28 : vector<64x256xf32>
    %38 = vector.broadcast %2 : vector<64x1xf32> to vector<64x256xf32>
    %39 = arith.mulf %38, %11 : vector<64x256xf32>
    %40 = arith.addf %37, %39 : vector<64x256xf32>
    %41 = vector.broadcast %3 : vector<64x1xf32> to vector<64x256xf32>
    %42 = arith.mulf %41, %35 : vector<64x256xf32>
    %43 = arith.addf %40, %42 : vector<64x256xf32>
    %44 = vector.broadcast %21 : vector<64x1xf32> to vector<64x256xf32>
    %45 = arith.addf %43, %44 : vector<64x256xf32>
    %cst_19 = arith.constant 0.000000e+00 : f32
    %46 = vector.broadcast %cst_19 : f32 to vector<64x256xf32>
    %47 = arith.subf %46, %45 : vector<64x256xf32>
    %48 = math.exp %47 : vector<64x256xf32>
    %cst_20 = arith.constant 1.000000e+00 : f32
    %49 = vector.broadcast %cst_20 : f32 to vector<64x256xf32>
    %50 = arith.addf %49, %48 : vector<64x256xf32>
    %51 = tpu.reciprocal %50 {approx = true} : vector<64x256xf32> -> vector<64x256xf32>
    %52 = arith.mulf %11, %51 : vector<64x256xf32>
    %53 = arith.index_cast %c0_i32 : i32 to index
    %c0_21 = arith.constant 0 : index
    %c0_22 = arith.constant 0 : index
    %54 = vector.load %arg7[%53, %c0_21, %c0_22] : memref<4x64x256xf32, #tpu.memory_space<vmem>>, vector<1x64x256xf32>
    %55 = vector.shape_cast %54 : vector<1x64x256xf32> to vector<64x256xf32>
    %56 = vector.shape_cast %52 : vector<64x256xf32> to vector<1x64x256xf32>
    tpu.vector_store %arg7[%53, %c0_21, %c0_22], %56 {strides = array<i32>} : memref<4x64x256xf32, #tpu.memory_space<vmem>>, vector<1x64x256xf32>,
    %c1_i32_23 = arith.constant 1 : i32
    %57 = arith.index_cast %c1_i32_23 : i32 to index
    %c0_24 = arith.constant 0 : index
    %c0_25 = arith.constant 0 : index
    %58 = vector.load %arg1[%57, %c0_24, %c0_25] : memref<4x64x256xf32, #tpu.memory_space<vmem>>, vector<1x64x256xf32>
    %59 = vector.shape_cast %58 : vector<1x64x256xf32> to vector<64x256xf32>
    %cst_26 = arith.constant dense<0.000000e+00> : vector<64xf32>
    %60 = vector.multi_reduction <add>, %59, %cst_26 [1] : vector<64x256xf32> to vector<64xf32>
    %61 = vector.shape_cast %60 : vector<64xf32> to vector<64x1xf32>
    %cst_27 = arith.constant 3.906250e-03 : f32
    %62 = vector.broadcast %cst_27 : f32 to vector<64x1xf32>
    %63 = arith.mulf %61, %62 : vector<64x1xf32>
    %cst_28 = arith.constant dense<0.000000e+00> : vector<8x1xf32>
    %64 = tpu.matmul %4, %63, %cst_28 {dimension_numbers = #tpu.dot_dimension_numbers<[1], [0], [0], [1], [0, 0, 1, 1], [], []>} : vector<8x64xf32>, vector<64x1xf32>, vector<8x1xf32> -> vector<8x1xf32>
    %65 = arith.addf %64, %5 : vector<8x1xf32>
    %cst_29 = arith.constant 0.000000e+00 : f32
    %66 = vector.broadcast %cst_29 : f32 to vector<8x1xf32>
    %67 = arith.maximumf %65, %66 : vector<8x1xf32>
    %cst_30 = arith.constant dense<0.000000e+00> : vector<64x1xf32>
    %68 = tpu.matmul %6, %67, %cst_30 {dimension_numbers = #tpu.dot_dimension_numbers<[1], [0], [0], [1], [0, 0, 1, 1], [], []>} : vector<64x8xf32>, vector<8x1xf32>, vector<64x1xf32> -> vector<64x1xf32>
    %69 = arith.addf %68, %7 : vector<64x1xf32>
    %c0_i32_31 = arith.constant 0 : i32
    %70 = vector.broadcast %c0_i32_31 : i32 to vector<1x256xi32>
    %71 = arith.cmpi sgt, %8, %70 : vector<1x256xi32>
    %c1_i32_32 = arith.constant 1 : i32
    %72 = tpu.dynamic_rotate %59 by %c1_i32_32 dim 1 : vector<64x256xf32>, i32 -> vector<64x256xf32>
    %cst_33 = arith.constant 0.000000e+00 : f32
    %73 = vector.shape_cast %71 : vector<1x256xi1> to vector<1x256xi1>
    %74 = vector.broadcast %73 : vector<1x256xi1> to vector<64x256xi1>
    %75 = vector.broadcast %cst_33 : f32 to vector<64x256xf32>
    %76 = arith.select %74, %72, %75 : vector<64x256xi1>, vector<64x256xf32>
    %c255_i32_34 = arith.constant 255 : i32
    %77 = vector.broadcast %c255_i32_34 : i32 to vector<1x256xi32>
    %78 = arith.cmpi slt, %8, %77 : vector<1x256xi32>
    %c255_i32_35 = arith.constant 255 : i32
    %79 = tpu.dynamic_rotate %59 by %c255_i32_35 dim 1 : vector<64x256xf32>, i32 -> vector<64x256xf32>
    %cst_36 = arith.constant 0.000000e+00 : f32
    %80 = vector.shape_cast %78 : vector<1x256xi1> to vector<1x256xi1>
    %81 = vector.broadcast %80 : vector<1x256xi1> to vector<64x256xi1>
    %82 = vector.broadcast %cst_36 : f32 to vector<64x256xf32>
    %83 = arith.select %81, %79, %82 : vector<64x256xi1>, vector<64x256xf32>
    %84 = vector.broadcast %1 : vector<64x1xf32> to vector<64x256xf32>
    %85 = arith.mulf %84, %76 : vector<64x256xf32>
    %86 = vector.broadcast %2 : vector<64x1xf32> to vector<64x256xf32>
    %87 = arith.mulf %86, %59 : vector<64x256xf32>
    %88 = arith.addf %85, %87 : vector<64x256xf32>
    %89 = vector.broadcast %3 : vector<64x1xf32> to vector<64x256xf32>
    %90 = arith.mulf %89, %83 : vector<64x256xf32>
    %91 = arith.addf %88, %90 : vector<64x256xf32>
    %92 = vector.broadcast %69 : vector<64x1xf32> to vector<64x256xf32>
    %93 = arith.addf %91, %92 : vector<64x256xf32>
    %cst_37 = arith.constant 0.000000e+00 : f32
    %94 = vector.broadcast %cst_37 : f32 to vector<64x256xf32>
    %95 = arith.subf %94, %93 : vector<64x256xf32>
    %96 = math.exp %95 : vector<64x256xf32>
    %cst_38 = arith.constant 1.000000e+00 : f32
    %97 = vector.broadcast %cst_38 : f32 to vector<64x256xf32>
    %98 = arith.addf %97, %96 : vector<64x256xf32>
    %99 = tpu.reciprocal %98 {approx = true} : vector<64x256xf32> -> vector<64x256xf32>
    %100 = arith.mulf %59, %99 : vector<64x256xf32>
    %101 = arith.index_cast %c1_i32_23 : i32 to index
    %c0_39 = arith.constant 0 : index
    %c0_40 = arith.constant 0 : index
    %102 = vector.load %arg7[%101, %c0_39, %c0_40] : memref<4x64x256xf32, #tpu.memory_space<vmem>>, vector<1x64x256xf32>
    %103 = vector.shape_cast %102 : vector<1x64x256xf32> to vector<64x256xf32>
    %104 = vector.shape_cast %100 : vector<64x256xf32> to vector<1x64x256xf32>
    tpu.vector_store %arg7[%101, %c0_39, %c0_40], %104 {strides = array<i32>} : memref<4x64x256xf32, #tpu.memory_space<vmem>>, vector<1x64x256xf32>,
    %c2_i32 = arith.constant 2 : i32
    %105 = arith.index_cast %c2_i32 : i32 to index
    %c0_41 = arith.constant 0 : index
    %c0_42 = arith.constant 0 : index
    %106 = vector.load %arg1[%105, %c0_41, %c0_42] : memref<4x64x256xf32, #tpu.memory_space<vmem>>, vector<1x64x256xf32>
    %107 = vector.shape_cast %106 : vector<1x64x256xf32> to vector<64x256xf32>
    %cst_43 = arith.constant dense<0.000000e+00> : vector<64xf32>
    %108 = vector.multi_reduction <add>, %107, %cst_43 [1] : vector<64x256xf32> to vector<64xf32>
    %109 = vector.shape_cast %108 : vector<64xf32> to vector<64x1xf32>
    %cst_44 = arith.constant 3.906250e-03 : f32
    %110 = vector.broadcast %cst_44 : f32 to vector<64x1xf32>
    %111 = arith.mulf %109, %110 : vector<64x1xf32>
    %cst_45 = arith.constant dense<0.000000e+00> : vector<8x1xf32>
    %112 = tpu.matmul %4, %111, %cst_45 {dimension_numbers = #tpu.dot_dimension_numbers<[1], [0], [0], [1], [0, 0, 1, 1], [], []>} : vector<8x64xf32>, vector<64x1xf32>, vector<8x1xf32> -> vector<8x1xf32>
    %113 = arith.addf %112, %5 : vector<8x1xf32>
    %cst_46 = arith.constant 0.000000e+00 : f32
    %114 = vector.broadcast %cst_46 : f32 to vector<8x1xf32>
    %115 = arith.maximumf %113, %114 : vector<8x1xf32>
    %cst_47 = arith.constant dense<0.000000e+00> : vector<64x1xf32>
    %116 = tpu.matmul %6, %115, %cst_47 {dimension_numbers = #tpu.dot_dimension_numbers<[1], [0], [0], [1], [0, 0, 1, 1], [], []>} : vector<64x8xf32>, vector<8x1xf32>, vector<64x1xf32> -> vector<64x1xf32>
    %117 = arith.addf %116, %7 : vector<64x1xf32>
    %c0_i32_48 = arith.constant 0 : i32
    %118 = vector.broadcast %c0_i32_48 : i32 to vector<1x256xi32>
    %119 = arith.cmpi sgt, %8, %118 : vector<1x256xi32>
    %c1_i32_49 = arith.constant 1 : i32
    %120 = tpu.dynamic_rotate %107 by %c1_i32_49 dim 1 : vector<64x256xf32>, i32 -> vector<64x256xf32>
    %cst_50 = arith.constant 0.000000e+00 : f32
    %121 = vector.shape_cast %119 : vector<1x256xi1> to vector<1x256xi1>
    %122 = vector.broadcast %121 : vector<1x256xi1> to vector<64x256xi1>
    %123 = vector.broadcast %cst_50 : f32 to vector<64x256xf32>
    %124 = arith.select %122, %120, %123 : vector<64x256xi1>, vector<64x256xf32>
    %c255_i32_51 = arith.constant 255 : i32
    %125 = vector.broadcast %c255_i32_51 : i32 to vector<1x256xi32>
    %126 = arith.cmpi slt, %8, %125 : vector<1x256xi32>
    %c255_i32_52 = arith.constant 255 : i32
    %127 = tpu.dynamic_rotate %107 by %c255_i32_52 dim 1 : vector<64x256xf32>, i32 -> vector<64x256xf32>
    %cst_53 = arith.constant 0.000000e+00 : f32
    %128 = vector.shape_cast %126 : vector<1x256xi1> to vector<1x256xi1>
    %129 = vector.broadcast %128 : vector<1x256xi1> to vector<64x256xi1>
    %130 = vector.broadcast %cst_53 : f32 to vector<64x256xf32>
    %131 = arith.select %129, %127, %130 : vector<64x256xi1>, vector<64x256xf32>
    %132 = vector.broadcast %1 : vector<64x1xf32> to vector<64x256xf32>
    %133 = arith.mulf %132, %124 : vector<64x256xf32>
    %134 = vector.broadcast %2 : vector<64x1xf32> to vector<64x256xf32>
    %135 = arith.mulf %134, %107 : vector<64x256xf32>
    %136 = arith.addf %133, %135 : vector<64x256xf32>
    %137 = vector.broadcast %3 : vector<64x1xf32> to vector<64x256xf32>
    %138 = arith.mulf %137, %131 : vector<64x256xf32>
    %139 = arith.addf %136, %138 : vector<64x256xf32>
    %140 = vector.broadcast %117 : vector<64x1xf32> to vector<64x256xf32>
    %141 = arith.addf %139, %140 : vector<64x256xf32>
    %cst_54 = arith.constant 0.000000e+00 : f32
    %142 = vector.broadcast %cst_54 : f32 to vector<64x256xf32>
    %143 = arith.subf %142, %141 : vector<64x256xf32>
    %144 = math.exp %143 : vector<64x256xf32>
    %cst_55 = arith.constant 1.000000e+00 : f32
    %145 = vector.broadcast %cst_55 : f32 to vector<64x256xf32>
    %146 = arith.addf %145, %144 : vector<64x256xf32>
    %147 = tpu.reciprocal %146 {approx = true} : vector<64x256xf32> -> vector<64x256xf32>
    %148 = arith.mulf %107, %147 : vector<64x256xf32>
    %149 = arith.index_cast %c2_i32 : i32 to index
    %c0_56 = arith.constant 0 : index
    %c0_57 = arith.constant 0 : index
    %150 = vector.load %arg7[%149, %c0_56, %c0_57] : memref<4x64x256xf32, #tpu.memory_space<vmem>>, vector<1x64x256xf32>
    %151 = vector.shape_cast %150 : vector<1x64x256xf32> to vector<64x256xf32>
    %152 = vector.shape_cast %148 : vector<64x256xf32> to vector<1x64x256xf32>
    tpu.vector_store %arg7[%149, %c0_56, %c0_57], %152 {strides = array<i32>} : memref<4x64x256xf32, #tpu.memory_space<vmem>>, vector<1x64x256xf32>,
    %c3_i32 = arith.constant 3 : i32
    %153 = arith.index_cast %c3_i32 : i32 to index
    %c0_58 = arith.constant 0 : index
    %c0_59 = arith.constant 0 : index
    %154 = vector.load %arg1[%153, %c0_58, %c0_59] : memref<4x64x256xf32, #tpu.memory_space<vmem>>, vector<1x64x256xf32>
    %155 = vector.shape_cast %154 : vector<1x64x256xf32> to vector<64x256xf32>
    %cst_60 = arith.constant dense<0.000000e+00> : vector<64xf32>
    %156 = vector.multi_reduction <add>, %155, %cst_60 [1] : vector<64x256xf32> to vector<64xf32>
    %157 = vector.shape_cast %156 : vector<64xf32> to vector<64x1xf32>
    %cst_61 = arith.constant 3.906250e-03 : f32
    %158 = vector.broadcast %cst_61 : f32 to vector<64x1xf32>
    %159 = arith.mulf %157, %158 : vector<64x1xf32>
    %cst_62 = arith.constant dense<0.000000e+00> : vector<8x1xf32>
    %160 = tpu.matmul %4, %159, %cst_62 {dimension_numbers = #tpu.dot_dimension_numbers<[1], [0], [0], [1], [0, 0, 1, 1], [], []>} : vector<8x64xf32>, vector<64x1xf32>, vector<8x1xf32> -> vector<8x1xf32>
    %161 = arith.addf %160, %5 : vector<8x1xf32>
    %cst_63 = arith.constant 0.000000e+00 : f32
    %162 = vector.broadcast %cst_63 : f32 to vector<8x1xf32>
    %163 = arith.maximumf %161, %162 : vector<8x1xf32>
    %cst_64 = arith.constant dense<0.000000e+00> : vector<64x1xf32>
    %164 = tpu.matmul %6, %163, %cst_64 {dimension_numbers = #tpu.dot_dimension_numbers<[1], [0], [0], [1], [0, 0, 1, 1], [], []>} : vector<64x8xf32>, vector<8x1xf32>, vector<64x1xf32> -> vector<64x1xf32>
    %165 = arith.addf %164, %7 : vector<64x1xf32>
    %c0_i32_65 = arith.constant 0 : i32
    %166 = vector.broadcast %c0_i32_65 : i32 to vector<1x256xi32>
    %167 = arith.cmpi sgt, %8, %166 : vector<1x256xi32>
    %c1_i32_66 = arith.constant 1 : i32
    %168 = tpu.dynamic_rotate %155 by %c1_i32_66 dim 1 : vector<64x256xf32>, i32 -> vector<64x256xf32>
    %cst_67 = arith.constant 0.000000e+00 : f32
    %169 = vector.shape_cast %167 : vector<1x256xi1> to vector<1x256xi1>
    %170 = vector.broadcast %169 : vector<1x256xi1> to vector<64x256xi1>
    %171 = vector.broadcast %cst_67 : f32 to vector<64x256xf32>
    %172 = arith.select %170, %168, %171 : vector<64x256xi1>, vector<64x256xf32>
    %c255_i32_68 = arith.constant 255 : i32
    %173 = vector.broadcast %c255_i32_68 : i32 to vector<1x256xi32>
    %174 = arith.cmpi slt, %8, %173 : vector<1x256xi32>
    %c255_i32_69 = arith.constant 255 : i32
    %175 = tpu.dynamic_rotate %155 by %c255_i32_69 dim 1 : vector<64x256xf32>, i32 -> vector<64x256xf32>
    %cst_70 = arith.constant 0.000000e+00 : f32
    %176 = vector.shape_cast %174 : vector<1x256xi1> to vector<1x256xi1>
    %177 = vector.broadcast %176 : vector<1x256xi1> to vector<64x256xi1>
    %178 = vector.broadcast %cst_70 : f32 to vector<64x256xf32>
    %179 = arith.select %177, %175, %178 : vector<64x256xi1>, vector<64x256xf32>
    %180 = vector.broadcast %1 : vector<64x1xf32> to vector<64x256xf32>
    %181 = arith.mulf %180, %172 : vector<64x256xf32>
    %182 = vector.broadcast %2 : vector<64x1xf32> to vector<64x256xf32>
    %183 = arith.mulf %182, %155 : vector<64x256xf32>
    %184 = arith.addf %181, %183 : vector<64x256xf32>
    %185 = vector.broadcast %3 : vector<64x1xf32> to vector<64x256xf32>
    %186 = arith.mulf %185, %179 : vector<64x256xf32>
    %187 = arith.addf %184, %186 : vector<64x256xf32>
    %188 = vector.broadcast %165 : vector<64x1xf32> to vector<64x256xf32>
    %189 = arith.addf %187, %188 : vector<64x256xf32>
    %cst_71 = arith.constant 0.000000e+00 : f32
    %190 = vector.broadcast %cst_71 : f32 to vector<64x256xf32>
    %191 = arith.subf %190, %189 : vector<64x256xf32>
    %192 = math.exp %191 : vector<64x256xf32>
    %cst_72 = arith.constant 1.000000e+00 : f32
    %193 = vector.broadcast %cst_72 : f32 to vector<64x256xf32>
    %194 = arith.addf %193, %192 : vector<64x256xf32>
    %195 = tpu.reciprocal %194 {approx = true} : vector<64x256xf32> -> vector<64x256xf32>
    %196 = arith.mulf %155, %195 : vector<64x256xf32>
    %197 = arith.index_cast %c3_i32 : i32 to index
    %c0_73 = arith.constant 0 : index
    %c0_74 = arith.constant 0 : index
    %198 = vector.load %arg7[%197, %c0_73, %c0_74] : memref<4x64x256xf32, #tpu.memory_space<vmem>>, vector<1x64x256xf32>
    %199 = vector.shape_cast %198 : vector<1x64x256xf32> to vector<64x256xf32>
    %200 = vector.shape_cast %196 : vector<64x256xf32> to vector<1x64x256xf32>
    tpu.vector_store %arg7[%197, %c0_73, %c0_74], %200 {strides = array<i32>} : memref<4x64x256xf32, #tpu.memory_space<vmem>>, vector<1x64x256xf32>,
    %c4_i32 = arith.constant 4 : i32
    return
  }
  func.func @transform_0(%arg0: i32) -> (i32, i32, i32) {
    %c0_i32 = arith.constant 0 : i32
    %c0_i32_0 = arith.constant 0 : i32
    %c0_i32_1 = arith.constant 0 : i32
    return %arg0, %c0_i32, %c0_i32_0 : i32, i32, i32
  }
  func.func @transform_1(%arg0: i32) -> (i32, i32) {
    %c0_i32 = arith.constant 0 : i32
    %c0_i32_0 = arith.constant 0 : i32
    %c0_i32_1 = arith.constant 0 : i32
    return %c0_i32, %c0_i32_0 : i32, i32
  }
  func.func @transform_2(%arg0: i32) -> (i32, i32) {
    %c0_i32 = arith.constant 0 : i32
    %c0_i32_0 = arith.constant 0 : i32
    %c0_i32_1 = arith.constant 0 : i32
    return %c0_i32, %c0_i32_0 : i32, i32
  }
  func.func @transform_3(%arg0: i32) -> (i32, i32) {
    %c0_i32 = arith.constant 0 : i32
    %c0_i32_0 = arith.constant 0 : i32
    %c0_i32_1 = arith.constant 0 : i32
    return %c0_i32, %c0_i32_0 : i32, i32
  }
  func.func @transform_4(%arg0: i32) -> (i32, i32) {
    %c0_i32 = arith.constant 0 : i32
    %c0_i32_0 = arith.constant 0 : i32
    %c0_i32_1 = arith.constant 0 : i32
    return %c0_i32, %c0_i32_0 : i32, i32
  }
  func.func @transform_5(%arg0: i32) -> (i32, i32) {
    %c0_i32 = arith.constant 0 : i32
    %c0_i32_0 = arith.constant 0 : i32
    %c0_i32_1 = arith.constant 0 : i32
    return %c0_i32, %c0_i32_0 : i32, i32
  }
  func.func @transform_6(%arg0: i32) -> (i32, i32, i32) {
    %c0_i32 = arith.constant 0 : i32
    %c0_i32_0 = arith.constant 0 : i32
    %c0_i32_1 = arith.constant 0 : i32
    return %arg0, %c0_i32, %c0_i32_0 : i32, i32, i32
  }
}

</mosaic_0001>

<llo_original>
// kernel: tpu_custom_call.1
$region0: #{tpu_custom_call.1}
  #allocation0 [shape = 'u32[]', space=smem, size = 0x4, offset = 0x4, fixed_abs, tag = 'smem constant byte address 0x4 - core index']
  #allocation1 [shape = 'u32[144,128]{1,0:T(1,128)}', space=vmem, size = 0x12000, scoped, tag = 'internal scratch']
  %s0 = inlined_call_operand.hbm [shape: f32[4,64,256], index: 0, kind: input, shape index: {}]
  %s1 = inlined_call_operand.vmem [shape: f32[8,64], index: 1, kind: input, shape index: {}]
  %s2 = inlined_call_operand.vmem [shape: f32[8,1], index: 2, kind: input, shape index: {}]
  %s3 = inlined_call_operand.vmem [shape: f32[64,8], index: 3, kind: input, shape index: {}]
  %s4 = inlined_call_operand.vmem [shape: f32[64,1], index: 4, kind: input, shape index: {}]
  %s5 = inlined_call_operand.vmem [shape: f32[64,3], index: 5, kind: input, shape index: {}]
  %s6 = inlined_call_operand.hbm [shape: f32[4,64,256], index: 6, kind: output, shape index: {}]
  %s7 = sld [smem:[#allocation0]]
  $region38: #{tpu_custom_call.1} parent=0
    _
  %s9 = ssub.s32 1, %s7
  %s10 = scalar_select 0, %s9, %s7
  $region1: #{tpu_custom_call.1} parent=0
    #allocation2 [shape = 'u8[262144]{0}', space=vmem, size = 0x40000, scoped, tag = 'input window, operand 0, single buffered']
    #allocation3 [shape = 's32[1]{0}', space=sflag, size = 0x4, scoped, tag = 'scoped memory for tpu_custom_call.1']
    #allocation4 [shape = 's32[1]{0}', space=sflag, size = 0x4, scoped, tag = 'scoped memory for tpu_custom_call.1']
    #allocation5 [shape = 'u8[262144]{0}', space=vmem, size = 0x40000, scoped, tag = 'output window, operand 0, single buffered']
    %11 = vsyncpa [#allocation3], 0
    %12 = vsyncpa [#allocation4], 0
    // Predicated region
    $region2: #{tpu_custom_call.1} parent=1 // pred_check
      _
    $region3: #{tpu_custom_call.1} parent=1 // pred_check_branch
      %14 = sbr.rel (0) target = $region5
    $region4: #{tpu_custom_call.1} parent=1 // pred_region
      %s16 = ssub.s32 8192, 8192
      %17 = vsyncadd [#allocation3], %s16
      %s18 = sshll.u32 [#allocation2], 4
      %s19 = int_to_ptr.vmem [resolvable:$true] %s18
      %24 = dma.hbm_to_vmem [thread:$0]  %s0, 8192, %s19, [#allocation3], 256, 256, 16
    $region5: #{tpu_custom_call.1} parent=1 // pred_fallthru
      _
    // Predicated region
    $region6: #{tpu_custom_call.1} parent=1 // pred_check
      _
    $region7: #{tpu_custom_call.1} parent=1 // pred_check_branch
      %26 = sbr.rel (0) target = $region9
    $region8: #{tpu_custom_call.1} parent=1 // pred_region
      _
    $region9: #{tpu_custom_call.1} parent=1 // pred_fallthru
      _
    // Predicated region
    $region10: #{tpu_custom_call.1} parent=1 // pred_check
      _
    $region11: #{tpu_custom_call.1} parent=1 // pred_check_branch
      %28 = sbr.rel (0) target = $region13
    $region12: #{tpu_custom_call.1} parent=1 // pred_region
      _
    $region13: #{tpu_custom_call.1} parent=1 // pred_fallthru
      _
    // Predicated region
    $region14: #{tpu_custom_call.1} parent=1 // pred_check
      _
    $region15: #{tpu_custom_call.1} parent=1 // pred_check_branch
      %30 = sbr.rel (0) target = $region17
    $region16: #{tpu_custom_call.1} parent=1 // pred_region
      _
    $region17: #{tpu_custom_call.1} parent=1 // pred_fallthru
      _
    // Predicated region
    $region18: #{tpu_custom_call.1} parent=1 // pred_check
      _
    $region19: #{tpu_custom_call.1} parent=1 // pred_check_branch
      %32 = sbr.rel (0) target = $region21
    $region20: #{tpu_custom_call.1} parent=1 // pred_region
      _
    $region21: #{tpu_custom_call.1} parent=1 // pred_fallthru
      _
    // Predicated region
    $region22: #{tpu_custom_call.1} parent=1 // pred_check
      _
    $region23: #{tpu_custom_call.1} parent=1 // pred_check_branch
      %34 = sbr.rel (0) target = $region25
    $region24: #{tpu_custom_call.1} parent=1 // pred_region
      _
    $region25: #{tpu_custom_call.1} parent=1 // pred_fallthru
      _
    // Predicated region
    $region26: #{tpu_custom_call.1} parent=1 // pred_check
      _
    $region27: #{tpu_custom_call.1} parent=1 // pred_check_branch
      %36 = sbr.rel (0) target = $region29
    $region28: #{tpu_custom_call.1} parent=1 // pred_region
      %37 = dma.done [#allocation3], 8192
    $region29: #{tpu_custom_call.1} parent=1 // pred_fallthru
      _
    %v38 = vld [vmem:[%s5] sm:$0xff]
    %v39 = vld [vmem:[%s5 + $0x8] sm:$0xff]
    %v40 = vld [vmem:[%s5 + $0x10] sm:$0xff]
    %v41 = vld [vmem:[%s5 + $0x18] sm:$0xff]
    %v42 = vld [vmem:[%s5 + $0x20] sm:$0xff]
    %v43 = vld [vmem:[%s5 + $0x28] sm:$0xff]
    %v44 = vld [vmem:[%s5 + $0x30] sm:$0xff]
    %v45 = vld [vmem:[%s5 + $0x38] sm:$0xff]
    %v46 = vld [vmem:[%s1] sm:$0xff]
    %v47 = vld [vmem:[%s2] sm:$0xff]
    %v48 = vld [vmem:[%s3] sm:$0xff]
    %v49 = vld [vmem:[%s3 + $0x8] sm:$0xff]
    %v50 = vld [vmem:[%s3 + $0x10] sm:$0xff]
    %v51 = vld [vmem:[%s3 + $0x18] sm:$0xff]
    %v52 = vld [vmem:[%s3 + $0x20] sm:$0xff]
    %v53 = vld [vmem:[%s3 + $0x28] sm:$0xff]
    %v54 = vld [vmem:[%s3 + $0x30] sm:$0xff]
    %v55 = vld [vmem:[%s3 + $0x38] sm:$0xff]
    %v56 = vld [vmem:[%s4] sm:$0xff]
    %v57 = vld [vmem:[%s4 + $0x8] sm:$0xff]
    %v58 = vld [vmem:[%s4 + $0x10] sm:$0xff]
    %v59 = vld [vmem:[%s4 + $0x18] sm:$0xff]
    %v60 = vld [vmem:[%s4 + $0x20] sm:$0xff]
    %v61 = vld [vmem:[%s4 + $0x28] sm:$0xff]
    %v62 = vld [vmem:[%s4 + $0x30] sm:$0xff]
    %v63 = vld [vmem:[%s4 + $0x38] sm:$0xff]
    %v64 = vlaneseq
    %v65 = vand.u32 %v64, 127
    %v66 = vadd.s32 %v65, 128
    %v67 = vld [vmem:[#allocation2] sm:$0xff]
    %v68 = vld [vmem:[#allocation2 + $0x8] sm:$0xff]
    %v69 = vld [vmem:[#allocation2 + $0x10] sm:$0xff]
    %v70 = vld [vmem:[#allocation2 + $0x18] sm:$0xff]
    %v71 = vld [vmem:[#allocation2 + $0x20] sm:$0xff]
    %v72 = vld [vmem:[#allocation2 + $0x28] sm:$0xff]
    %v73 = vld [vmem:[#allocation2 + $0x30] sm:$0xff]
    %v74 = vld [vmem:[#allocation2 + $0x38] sm:$0xff]
    %v75 = vld [vmem:[#allocation2 + $0x40] sm:$0xff]
    %v76 = vld [vmem:[#allocation2 + $0x48] sm:$0xff]
    %v77 = vld [vmem:[#allocation2 + $0x50] sm:$0xff]
    %v78 = vld [vmem:[#allocation2 + $0x58] sm:$0xff]
    %v79 = vld [vmem:[#allocation2 + $0x60] sm:$0xff]
    %v80 = vld [vmem:[#allocation2 + $0x68] sm:$0xff]
    %v81 = vld [vmem:[#allocation2 + $0x70] sm:$0xff]
    %v82 = vld [vmem:[#allocation2 + $0x78] sm:$0xff]
    %v83 = vadd.f32 %v67, %v68
    %84 = vadd.xlane.f32.xlu0 %v83
    %v85 = vpop.xlane.xlu0 %84
    %v86 = vadd.f32 %v69, %v70
    %87 = vadd.xlane.f32.xlu0 %v86
    %v88 = vpop.xlane.xlu0 %87
    %v89 = vadd.f32 %v71, %v72
    %90 = vadd.xlane.f32.xlu0 %v89
    %v91 = vpop.xlane.xlu0 %90
    %v92 = vadd.f32 %v73, %v74
    %93 = vadd.xlane.f32.xlu0 %v92
    %v94 = vpop.xlane.xlu0 %93
    %v95 = vadd.f32 %v75, %v76
    %96 = vadd.xlane.f32.xlu0 %v95
    %v97 = vpop.xlane.xlu0 %96
    %v98 = vadd.f32 %v77, %v78
    %99 = vadd.xlane.f32.xlu0 %v98
    %v100 = vpop.xlane.xlu0 %99
    %v101 = vadd.f32 %v79, %v80
    %102 = vadd.xlane.f32.xlu0 %v101
    %v103 = vpop.xlane.xlu0 %102
    %v104 = vadd.f32 %v81, %v82
    %105 = vadd.xlane.f32.xlu0 %v104
    %v106 = vpop.xlane.xlu0 %105
    %v107 = vmul.f32 %v85, 0.00390625
    %v108 = vmul.f32 %v88, 0.00390625
    %v109 = vmul.f32 %v91, 0.00390625
    %v110 = vmul.f32 %v94, 0.00390625
    %v111 = vmul.f32 %v97, 0.00390625
    %v112 = vmul.f32 %v100, 0.00390625
    %v113 = vmul.f32 %v103, 0.00390625
    %v114 = vmul.f32 %v106, 0.00390625
    %vm115 = vcmask 523264
    %v117 = vsel %vm115, %v46, 0
    %119 = vmatprep.subr.mxu0 0.0
    %120 = vmatpush1.msra.mxu0 %v107
    %121 = vmatprep.subr.mxu0 0.0
    %122 = vmatpush1.msra.mxu0 %v108
    %123 = vmatprep.subr.mxu0 0.0
    %124 = vmatpush1.msra.mxu0 %v109
    %125 = vmatprep.subr.mxu0 0.0
    %126 = vmatpush1.msra.mxu0 %v110
    %127 = vmatprep.subr.mxu0 0.0
    %128 = vmatpush1.msra.mxu0 %v111
    %129 = vmatprep.subr.mxu0 0.0
    %130 = vmatpush1.msra.mxu0 %v112
    %131 = vmatprep.subr.mxu0 0.0
    %132 = vmatpush1.msra.mxu0 %v113
    %133 = vmatprep.subr.mxu0 0.0
    %134 = vmatpush1.msra.mxu0 %v114
    %135 = vmatprep.subr.mxu0 0.0
    %136 = vmatpush1.msra.mxu0 0.0
    %137 = vmatprep.subr.mxu0 0.0
    %138 = vmatpush1.msra.mxu0 0.0
    %139 = vmatprep.subr.mxu0 0.0
    %140 = vmatpush1.msra.mxu0 0.0
    %141 = vmatprep.subr.mxu0 0.0
    %142 = vmatpush1.msra.mxu0 0.0
    %143 = vmatprep.subr.mxu0 0.0
    %144 = vmatpush1.msra.mxu0 0.0
    %145 = vmatprep.subr.mxu0 0.0
    %146 = vmatpush1.msra.mxu0 0.0
    %147 = vmatprep.subr.mxu0 0.0
    %148 = vmatpush1.msra.mxu0 0.0
    %149 = vmatprep.subr.mxu0 0.0
    %150 = vmatpush1.msra.mxu0 0.0
    %151 = vmatprep.subr.mxu0 0.0
    %152 = vmatpush1.msra.mxu0 0.0
    %153 = vmatprep.subr.mxu0 0.0
    %154 = vmatpush1.msra.mxu0 0.0
    %155 = vmatprep.subr.mxu0 0.0
    %156 = vmatpush1.msra.mxu0 0.0
    %157 = vmatprep.subr.mxu0 0.0
    %158 = vmatpush1.msra.mxu0 0.0
    %159 = vmatprep.subr.mxu0 0.0
    %160 = vmatpush1.msra.mxu0 0.0
    %161 = vmatprep.subr.mxu0 0.0
    %162 = vmatpush1.msra.mxu0 0.0
    %163 = vmatprep.subr.mxu0 0.0
    %164 = vmatpush1.msra.mxu0 0.0
    %165 = vmatprep.subr.mxu0 0.0
    %166 = vmatpush1.msra.mxu0 0.0
    %167 = vmatprep.subr.mxu0 0.0
    %168 = vmatpush1.msra.mxu0 0.0
    %169 = vmatprep.subr.mxu0 0.0
    %170 = vmatpush1.msra.mxu0 0.0
    %171 = vmatprep.subr.mxu0 0.0
    %172 = vmatpush1.msra.mxu0 0.0
    %173 = vmatprep.subr.mxu0 0.0
    %174 = vmatpush1.msra.mxu0 0.0
    %175 = vmatprep.subr.mxu0 0.0
    %176 = vmatpush1.msra.mxu0 0.0
    %177 = vmatprep.subr.mxu0 0.0
    %178 = vmatpush1.msra.mxu0 0.0
    %179 = vmatprep.subr.mxu0 0.0
    %180 = vmatpush1.msra.mxu0 0.0
    %181 = vmatprep.subr.mxu0 0.0
    %182 = vmatpush1.msra.mxu0 0.0
    %183 = vmatprep.mubr.f32.mxu0 0.0
    %184 = vmatmul.mubr.f32.gmra.mrb[0].mxu0 %v117
    %v185 = vpop.f32.mrb[0].mxu0
    %v186 = vadd.f32 %v47, %v185
    %v187 = vpop.f32.mrb[0].mxu0
    %188 = vdwg.mxu0
    %v189 = vmax.f32 %v186, 0.0
    %vm190 = vcmask 64512
    %v192 = vsel %vm190, %v48, 0
    %v195 = vsel %vm190, %v49, 0
    %v198 = vsel %vm190, %v50, 0
    %v201 = vsel %vm190, %v51, 0
    %v204 = vsel %vm190, %v52, 0
    %v207 = vsel %vm190, %v53, 0
    %v210 = vsel %vm190, %v54, 0
    %v213 = vsel %vm190, %v55, 0
    %215 = vmatprep.subr.mxu0 0.0
    %216 = vmatpush1.msra.mxu0 %v189
    %217 = vmatprep.subr.mxu0 0.0
    %218 = vmatpush1.msra.mxu0 0.0
    %219 = vmatprep.subr.mxu0 0.0
    %220 = vmatpush1.msra.mxu0 0.0
    %221 = vmatprep.subr.mxu0 0.0
    %222 = vmatpush1.msra.mxu0 0.0
    %223 = vmatprep.subr.mxu0 0.0
    %224 = vmatpush1.msra.mxu0 0.0
    %225 = vmatprep.subr.mxu0 0.0
    %226 = vmatpush1.msra.mxu0 0.0
    %227 = vmatprep.subr.mxu0 0.0
    %228 = vmatpush1.msra.mxu0 0.0
    %229 = vmatprep.subr.mxu0 0.0
    %230 = vmatpush1.msra.mxu0 0.0
    %231 = vmatprep.subr.mxu0 0.0
    %232 = vmatpush1.msra.mxu0 0.0
    %233 = vmatprep.subr.mxu0 0.0
    %234 = vmatpush1.msra.mxu0 0.0
    %235 = vmatprep.subr.mxu0 0.0
    %236 = vmatpush1.msra.mxu0 0.0
    %237 = vmatprep.subr.mxu0 0.0
    %238 = vmatpush1.msra.mxu0 0.0
    %239 = vmatprep.subr.mxu0 0.0
    %240 = vmatpush1.msra.mxu0 0.0
    %241 = vmatprep.subr.mxu0 0.0
    %242 = vmatpush1.msra.mxu0 0.0
    %243 = vmatprep.subr.mxu0 0.0
    %244 = vmatpush1.msra.mxu0 0.0
    %245 = vmatprep.subr.mxu0 0.0
    %246 = vmatpush1.msra.mxu0 0.0
    %247 = vmatprep.subr.mxu0 0.0
    %248 = vmatpush1.msra.mxu0 0.0
    %249 = vmatprep.subr.mxu0 0.0
    %250 = vmatpush1.msra.mxu0 0.0
    %251 = vmatprep.subr.mxu0 0.0
    %252 = vmatpush1.msra.mxu0 0.0
    %253 = vmatprep.subr.mxu0 0.0
    %254 = vmatpush1.msra.mxu0 0.0
    %255 = vmatprep.subr.mxu0 0.0
    %256 = vmatpush1.msra.mxu0 0.0
    %257 = vmatprep.subr.mxu0 0.0
    %258 = vmatpush1.msra.mxu0 0.0
    %259 = vmatprep.subr.mxu0 0.0
    %260 = vmatpush1.msra.mxu0 0.0
    %261 = vmatprep.subr.mxu0 0.0
    %262 = vmatpush1.msra.mxu0 0.0
    %263 = vmatprep.subr.mxu0 0.0
    %264 = vmatpush1.msra.mxu0 0.0
    %265 = vmatprep.subr.mxu0 0.0
    %266 = vmatpush1.msra.mxu0 0.0
    %267 = vmatprep.subr.mxu0 0.0
    %268 = vmatpush1.msra.mxu0 0.0
    %269 = vmatprep.subr.mxu0 0.0
    %270 = vmatpush1.msra.mxu0 0.0
    %271 = vmatprep.subr.mxu0 0.0
    %272 = vmatpush1.msra.mxu0 0.0
    %273 = vmatprep.subr.mxu0 0.0
    %274 = vmatpush1.msra.mxu0 0.0
    %275 = vmatprep.subr.mxu0 0.0
    %276 = vmatpush1.msra.mxu0 0.0
    %277 = vmatprep.subr.mxu0 0.0
    %278 = vmatpush1.msra.mxu0 0.0
    %279 = vmatprep.mubr.f32.mxu0 0.0
    %280 = vmatmul.mubr.f32.gmra.mrb[0].mxu0 %v192
    %v281 = vpop.f32.mrb[0].mxu0
    %v282 = vadd.f32 %v56, %v281
    %v283 = vpop.f32.mrb[0].mxu0
    %284 = vmatprep.mubr.f32.mxu0 0.0
    %285 = vmatmul.mubr.f32.gmra.mrb[0].mxu0 %v195
    %v286 = vpop.f32.mrb[0].mxu0
    %v287 = vadd.f32 %v57, %v286
    %v288 = vpop.f32.mrb[0].mxu0
    %289 = vmatprep.mubr.f32.mxu0 0.0
    %290 = vmatmul.mubr.f32.gmra.mrb[0].mxu0 %v198
    %v291 = vpop.f32.mrb[0].mxu0
    %v292 = vadd.f32 %v58, %v291
    %v293 = vpop.f32.mrb[0].mxu0
    %294 = vmatprep.mubr.f32.mxu0 0.0
    %295 = vmatmul.mubr.f32.gmra.mrb[0].mxu0 %v201
    %v296 = vpop.f32.mrb[0].mxu0
    %v297 = vadd.f32 %v59, %v296
    %v298 = vpop.f32.mrb[0].mxu0
    %299 = vmatprep.mubr.f32.mxu0 0.0
    %300 = vmatmul.mubr.f32.gmra.mrb[0].mxu0 %v204
    %v301 = vpop.f32.mrb[0].mxu0
    %v302 = vadd.f32 %v60, %v301
    %v303 = vpop.f32.mrb[0].mxu0
    %304 = vmatprep.mubr.f32.mxu0 0.0
    %305 = vmatmul.mubr.f32.gmra.mrb[0].mxu0 %v207
    %v306 = vpop.f32.mrb[0].mxu0
    %v307 = vadd.f32 %v61, %v306
    %v308 = vpop.f32.mrb[0].mxu0
    %309 = vmatprep.mubr.f32.mxu0 0.0
    %310 = vmatmul.mubr.f32.gmra.mrb[0].mxu0 %v210
    %v311 = vpop.f32.mrb[0].mxu0
    %v312 = vadd.f32 %v62, %v311
    %v313 = vpop.f32.mrb[0].mxu0
    %314 = vmatprep.mubr.f32.mxu0 0.0
    %315 = vmatmul.mubr.f32.gmra.mrb[0].mxu0 %v213
    %v316 = vpop.f32.mrb[0].mxu0
    %v317 = vadd.f32 %v63, %v316
    %v318 = vpop.f32.mrb[0].mxu0
    %319 = vdwg.mxu0
    %vm320 = vcmp.gt.s32.totalorder %v65, 0
    %vm321 = vcmp.gt.s32.totalorder %v66, 0
    %322 = vrot.lane.b32.xlu0 %v67, 1
    %v323 = vpop.permute.xlu0 %322
    %324 = vrot.lane.b32.xlu0 %v69, 1
    %v325 = vpop.permute.xlu0 %324
    %326 = vrot.lane.b32.xlu0 %v71, 1
    %v327 = vpop.permute.xlu0 %326
    %328 = vrot.lane.b32.xlu0 %v73, 1
    %v329 = vpop.permute.xlu0 %328
    %330 = vrot.lane.b32.xlu0 %v75, 1
    %v331 = vpop.permute.xlu0 %330
    %332 = vrot.lane.b32.xlu0 %v77, 1
    %v333 = vpop.permute.xlu0 %332
    %334 = vrot.lane.b32.xlu0 %v79, 1
    %v335 = vpop.permute.xlu0 %334
    %336 = vrot.lane.b32.xlu0 %v81, 1
    %v337 = vpop.permute.xlu0 %336
    %338 = vrot.lane.b32.xlu0 %v68, 1
    %v339 = vpop.permute.xlu0 %338
    %340 = vrot.lane.b32.xlu0 %v70, 1
    %v341 = vpop.permute.xlu0 %340
    %342 = vrot.lane.b32.xlu0 %v72, 1
    %v343 = vpop.permute.xlu0 %342
    %344 = vrot.lane.b32.xlu0 %v74, 1
    %v345 = vpop.permute.xlu0 %344
    %346 = vrot.lane.b32.xlu0 %v76, 1
    %v347 = vpop.permute.xlu0 %346
    %348 = vrot.lane.b32.xlu0 %v78, 1
    %v349 = vpop.permute.xlu0 %348
    %350 = vrot.lane.b32.xlu0 %v80, 1
    %v351 = vpop.permute.xlu0 %350
    %352 = vrot.lane.b32.xlu0 %v82, 1
    %v353 = vpop.permute.xlu0 %352
    %vm354 = vcmp.lt.s32.totalorder %v65, 1
    %v355 = vsel %vm354, %v323, %v339
    %v356 = vsel %vm354, %v325, %v341
    %v357 = vsel %vm354, %v327, %v343
    %v358 = vsel %vm354, %v329, %v345
    %v359 = vsel %vm354, %v331, %v347
    %v360 = vsel %vm354, %v333, %v349
    %v361 = vsel %vm354, %v335, %v351
    %v362 = vsel %vm354, %v337, %v353
    %v363 = vsel %vm354, %v339, %v323
    %v364 = vsel %vm354, %v341, %v325
    %v365 = vsel %vm354, %v343, %v327
    %v366 = vsel %vm354, %v345, %v329
    %v367 = vsel %vm354, %v347, %v331
    %v368 = vsel %vm354, %v349, %v333
    %v369 = vsel %vm354, %v351, %v335
    %v370 = vsel %vm354, %v353, %v337
    %v371 = vsel %vm320, 1, 0
    %v372 = vsel %vm321, 1, 0
    %vm373 = vcmp.eq.s32.totalorder %v371, 1
    %vm374 = vcmp.eq.s32.totalorder %v372, 1
    %v375 = vsel %vm373, %v363, 0.0
    %v376 = vsel %vm374, %v355, 0.0
    %v377 = vsel %vm373, %v364, 0.0
    %v378 = vsel %vm374, %v356, 0.0
    %v379 = vsel %vm373, %v365, 0.0
    %v380 = vsel %vm374, %v357, 0.0
    %v381 = vsel %vm373, %v366, 0.0
    %v382 = vsel %vm374, %v358, 0.0
    %v383 = vsel %vm373, %v367, 0.0
    %v384 = vsel %vm374, %v359, 0.0
    %v385 = vsel %vm373, %v368, 0.0
    %v386 = vsel %vm374, %v360, 0.0
    %v387 = vsel %vm373, %v369, 0.0
    %v388 = vsel %vm374, %v361, 0.0
    %v389 = vsel %vm373, %v370, 0.0
    %v390 = vsel %vm374, %v362, 0.0
    %vm391 = vcmp.lt.s32.totalorder %v65, 255
    %vm392 = vcmp.lt.s32.totalorder %v66, 255
    %393 = vrot.lane.b32.xlu0 %v67, 127
    %v394 = vpop.permute.xlu0 %393
    %395 = vrot.lane.b32.xlu0 %v69, 127
    %v396 = vpop.permute.xlu0 %395
    %397 = vrot.lane.b32.xlu0 %v71, 127
    %v398 = vpop.permute.xlu0 %397
    %399 = vrot.lane.b32.xlu0 %v73, 127
    %v400 = vpop.permute.xlu0 %399
    %401 = vrot.lane.b32.xlu0 %v75, 127
    %v402 = vpop.permute.xlu0 %401
    %403 = vrot.lane.b32.xlu0 %v77, 127
    %v404 = vpop.permute.xlu0 %403
    %405 = vrot.lane.b32.xlu0 %v79, 127
    %v406 = vpop.permute.xlu0 %405
    %407 = vrot.lane.b32.xlu0 %v81, 127
    %v408 = vpop.permute.xlu0 %407
    %409 = vrot.lane.b32.xlu0 %v68, 127
    %v410 = vpop.permute.xlu0 %409
    %411 = vrot.lane.b32.xlu0 %v70, 127
    %v412 = vpop.permute.xlu0 %411
    %413 = vrot.lane.b32.xlu0 %v72, 127
    %v414 = vpop.permute.xlu0 %413
    %415 = vrot.lane.b32.xlu0 %v74, 127
    %v416 = vpop.permute.xlu0 %415
    %417 = vrot.lane.b32.xlu0 %v76, 127
    %v418 = vpop.permute.xlu0 %417
    %419 = vrot.lane.b32.xlu0 %v78, 127
    %v420 = vpop.permute.xlu0 %419
    %421 = vrot.lane.b32.xlu0 %v80, 127
    %v422 = vpop.permute.xlu0 %421
    %423 = vrot.lane.b32.xlu0 %v82, 127
    %v424 = vpop.permute.xlu0 %423
    %vm425 = vcmp.lt.s32.totalorder %v65, 127
    %v426 = vsel %vm425, %v394, %v410
    %v427 = vsel %vm425, %v396, %v412
    %v428 = vsel %vm425, %v398, %v414
    %v429 = vsel %vm425, %v400, %v416
    %v430 = vsel %vm425, %v402, %v418
    %v431 = vsel %vm425, %v404, %v420
    %v432 = vsel %vm425, %v406, %v422
    %v433 = vsel %vm425, %v408, %v424
    %v434 = vsel %vm425, %v410, %v394
    %v435 = vsel %vm425, %v412, %v396
    %v436 = vsel %vm425, %v414, %v398
    %v437 = vsel %vm425, %v416, %v400
    %v438 = vsel %vm425, %v418, %v402
    %v439 = vsel %vm425, %v420, %v404
    %v440 = vsel %vm425, %v422, %v406
    %v441 = vsel %vm425, %v424, %v408
    %v442 = vsel %vm391, 1, 0
    %v443 = vsel %vm392, 1, 0
    %vm444 = vcmp.eq.s32.totalorder %v442, 1
    %vm445 = vcmp.eq.s32.totalorder %v443, 1
    %v446 = vsel %vm444, %v426, 0.0
    %v447 = vsel %vm445, %v434, 0.0
    %v448 = vsel %vm444, %v427, 0.0
    %v449 = vsel %vm445, %v435, 0.0
    %v450 = vsel %vm444, %v428, 0.0
    %v451 = vsel %vm445, %v436, 0.0
    %v452 = vsel %vm444, %v429, 0.0
    %v453 = vsel %vm445, %v437, 0.0
    %v454 = vsel %vm444, %v430, 0.0
    %v455 = vsel %vm445, %v438, 0.0
    %v456 = vsel %vm444, %v431, 0.0
    %v457 = vsel %vm445, %v439, 0.0
    %v458 = vsel %vm444, %v432, 0.0
    %v459 = vsel %vm445, %v440, 0.0
    %v460 = vsel %vm444, %v433, 0.0
    %v461 = vsel %vm445, %v441, 0.0
    %463 = vset.pattern.permute.xlu0 0
    %464 = vperm.xlu0 %463, %v38
    %v465 = vpop.permute.xlu0 %464
    %468 = vset.pattern.permute.xlu0 0
    %469 = vperm.xlu0 %468, %v39
    %v470 = vpop.permute.xlu0 %469
    %473 = vset.pattern.permute.xlu0 0
    %474 = vperm.xlu0 %473, %v40
    %v475 = vpop.permute.xlu0 %474
    %478 = vset.pattern.permute.xlu0 0
    %479 = vperm.xlu0 %478, %v41
    %v480 = vpop.permute.xlu0 %479
    %483 = vset.pattern.permute.xlu0 0
    %484 = vperm.xlu0 %483, %v42
    %v485 = vpop.permute.xlu0 %484
    %488 = vset.pattern.permute.xlu0 0
    %489 = vperm.xlu0 %488, %v43
    %v490 = vpop.permute.xlu0 %489
    %493 = vset.pattern.permute.xlu0 0
    %494 = vperm.xlu0 %493, %v44
    %v495 = vpop.permute.xlu0 %494
    %498 = vset.pattern.permute.xlu0 0
    %499 = vperm.xlu0 %498, %v45
    %v500 = vpop.permute.xlu0 %499
    %v502 = vmul.f32 %v465, %v375
    %v503 = vmul.f32 %v465, %v376
    %v504 = vmul.f32 %v470, %v377
    %v505 = vmul.f32 %v470, %v378
    %v506 = vmul.f32 %v475, %v379
    %v507 = vmul.f32 %v475, %v380
    %v508 = vmul.f32 %v480, %v381
    %v509 = vmul.f32 %v480, %v382
    %v510 = vmul.f32 %v485, %v383
    %v511 = vmul.f32 %v485, %v384
    %v512 = vmul.f32 %v490, %v385
    %v513 = vmul.f32 %v490, %v386
    %v514 = vmul.f32 %v495, %v387
    %v515 = vmul.f32 %v495, %v388
    %v516 = vmul.f32 %v500, %v389
    %v517 = vmul.f32 %v500, %v390
    %518 = vset.pattern.permute.xlu0 1
    %519 = vperm.xlu0 %518, %v38
    %v520 = vpop.permute.xlu0 %519
    %522 = vset.pattern.permute.xlu0 1
    %523 = vperm.xlu0 %522, %v39
    %v524 = vpop.permute.xlu0 %523
    %526 = vset.pattern.permute.xlu0 1
    %527 = vperm.xlu0 %526, %v40
    %v528 = vpop.permute.xlu0 %527
    %530 = vset.pattern.permute.xlu0 1
    %531 = vperm.xlu0 %530, %v41
    %v532 = vpop.permute.xlu0 %531
    %534 = vset.pattern.permute.xlu0 1
    %535 = vperm.xlu0 %534, %v42
    %v536 = vpop.permute.xlu0 %535
    %538 = vset.pattern.permute.xlu0 1
    %539 = vperm.xlu0 %538, %v43
    %v540 = vpop.permute.xlu0 %539
    %542 = vset.pattern.permute.xlu0 1
    %543 = vperm.xlu0 %542, %v44
    %v544 = vpop.permute.xlu0 %543
    %546 = vset.pattern.permute.xlu0 1
    %547 = vperm.xlu0 %546, %v45
    %v548 = vpop.permute.xlu0 %547
    %v550 = vmul.f32 %v520, %v67
    %v551 = vmul.f32 %v520, %v68
    %v552 = vmul.f32 %v524, %v69
    %v553 = vmul.f32 %v524, %v70
    %v554 = vmul.f32 %v528, %v71
    %v555 = vmul.f32 %v528, %v72
    %v556 = vmul.f32 %v532, %v73
    %v557 = vmul.f32 %v532, %v74
    %v558 = vmul.f32 %v536, %v75
    %v559 = vmul.f32 %v536, %v76
    %v560 = vmul.f32 %v540, %v77
    %v561 = vmul.f32 %v540, %v78
    %v562 = vmul.f32 %v544, %v79
    %v563 = vmul.f32 %v544, %v80
    %v564 = vmul.f32 %v548, %v81
    %v565 = vmul.f32 %v548, %v82
    %v566 = vadd.f32 %v502, %v550
    %v567 = vadd.f32 %v503, %v551
    %v568 = vadd.f32 %v504, %v552
    %v569 = vadd.f32 %v505, %v553
    %v570 = vadd.f32 %v506, %v554
    %v571 = vadd.f32 %v507, %v555
    %v572 = vadd.f32 %v508, %v556
    %v573 = vadd.f32 %v509, %v557
    %v574 = vadd.f32 %v510, %v558
    %v575 = vadd.f32 %v511, %v559
    %v576 = vadd.f32 %v512, %v560
    %v577 = vadd.f32 %v513, %v561
    %v578 = vadd.f32 %v514, %v562
    %v579 = vadd.f32 %v515, %v563
    %v580 = vadd.f32 %v516, %v564
    %v581 = vadd.f32 %v517, %v565
    %582 = vset.pattern.permute.xlu0 2
    %583 = vperm.xlu0 %582, %v38
    %v584 = vpop.permute.xlu0 %583
    %586 = vset.pattern.permute.xlu0 2
    %587 = vperm.xlu0 %586, %v39
    %v588 = vpop.permute.xlu0 %587
    %590 = vset.pattern.permute.xlu0 2
    %591 = vperm.xlu0 %590, %v40
    %v592 = vpop.permute.xlu0 %591
    %594 = vset.pattern.permute.xlu0 2
    %595 = vperm.xlu0 %594, %v41
    %v596 = vpop.permute.xlu0 %595
    %598 = vset.pattern.permute.xlu0 2
    %599 = vperm.xlu0 %598, %v42
    %v600 = vpop.permute.xlu0 %599
    %602 = vset.pattern.permute.xlu0 2
    %603 = vperm.xlu0 %602, %v43
    %v604 = vpop.permute.xlu0 %603
    %606 = vset.pattern.permute.xlu0 2
    %607 = vperm.xlu0 %606, %v44
    %v608 = vpop.permute.xlu0 %607
    %610 = vset.pattern.permute.xlu0 2
    %611 = vperm.xlu0 %610, %v45
    %v612 = vpop.permute.xlu0 %611
    %v614 = vmul.f32 %v584, %v446
    %v615 = vmul.f32 %v584, %v447
    %v616 = vmul.f32 %v588, %v448
    %v617 = vmul.f32 %v588, %v449
    %v618 = vmul.f32 %v592, %v450
    %v619 = vmul.f32 %v592, %v451
    %v620 = vmul.f32 %v596, %v452
    %v621 = vmul.f32 %v596, %v453
    %v622 = vmul.f32 %v600, %v454
    %v623 = vmul.f32 %v600, %v455
    %v624 = vmul.f32 %v604, %v456
    %v625 = vmul.f32 %v604, %v457
    %v626 = vmul.f32 %v608, %v458
    %v627 = vmul.f32 %v608, %v459
    %v628 = vmul.f32 %v612, %v460
    %v629 = vmul.f32 %v612, %v461
    %v630 = vadd.f32 %v566, %v614
    %v631 = vadd.f32 %v567, %v615
    %v632 = vadd.f32 %v568, %v616
    %v633 = vadd.f32 %v569, %v617
    %v634 = vadd.f32 %v570, %v618
    %v635 = vadd.f32 %v571, %v619
    %v636 = vadd.f32 %v572, %v620
    %v637 = vadd.f32 %v573, %v621
    %v638 = vadd.f32 %v574, %v622
    %v639 = vadd.f32 %v575, %v623
    %v640 = vadd.f32 %v576, %v624
    %v641 = vadd.f32 %v577, %v625
    %v642 = vadd.f32 %v578, %v626
    %v643 = vadd.f32 %v579, %v627
    %v644 = vadd.f32 %v580, %v628
    %v645 = vadd.f32 %v581, %v629
    %647 = vset.pattern.permute.xlu0 0
    %648 = vperm.xlu0 %647, %v282
    %v649 = vpop.permute.xlu0 %648
    %652 = vset.pattern.permute.xlu0 0
    %653 = vperm.xlu0 %652, %v287
    %v654 = vpop.permute.xlu0 %653
    %657 = vset.pattern.permute.xlu0 0
    %658 = vperm.xlu0 %657, %v292
    %v659 = vpop.permute.xlu0 %658
    %662 = vset.pattern.permute.xlu0 0
    %663 = vperm.xlu0 %662, %v297
    %v664 = vpop.permute.xlu0 %663
    %667 = vset.pattern.permute.xlu0 0
    %668 = vperm.xlu0 %667, %v302
    %v669 = vpop.permute.xlu0 %668
    %672 = vset.pattern.permute.xlu0 0
    %673 = vperm.xlu0 %672, %v307
    %v674 = vpop.permute.xlu0 %673
    %677 = vset.pattern.permute.xlu0 0
    %678 = vperm.xlu0 %677, %v312
    %v679 = vpop.permute.xlu0 %678
    %682 = vset.pattern.permute.xlu0 0
    %683 = vperm.xlu0 %682, %v317
    %v684 = vpop.permute.xlu0 %683
    %v686 = vadd.f32 %v630, %v649
    %v687 = vadd.f32 %v631, %v649
    %v688 = vadd.f32 %v632, %v654
    %v689 = vadd.f32 %v633, %v654
    %v690 = vadd.f32 %v634, %v659
    %v691 = vadd.f32 %v635, %v659
    %v692 = vadd.f32 %v636, %v664
    %v693 = vadd.f32 %v637, %v664
    %v694 = vadd.f32 %v638, %v669
    %v695 = vadd.f32 %v639, %v669
    %v696 = vadd.f32 %v640, %v674
    %v697 = vadd.f32 %v641, %v674
    %v698 = vadd.f32 %v642, %v679
    %v699 = vadd.f32 %v643, %v679
    %v700 = vadd.f32 %v644, %v684
    %v701 = vadd.f32 %v645, %v684
    %v702 = vsub.f32 0.0, %v686
    %v703 = vsub.f32 0.0, %v687
    %v704 = vsub.f32 0.0, %v688
    %v705 = vsub.f32 0.0, %v689
    %v706 = vsub.f32 0.0, %v690
    %v707 = vsub.f32 0.0, %v691
    %v708 = vsub.f32 0.0, %v692
    %v709 = vsub.f32 0.0, %v693
    %v710 = vsub.f32 0.0, %v694
    %v711 = vsub.f32 0.0, %v695
    %v712 = vsub.f32 0.0, %v696
    %v713 = vsub.f32 0.0, %v697
    %v714 = vsub.f32 0.0, %v698
    %v715 = vsub.f32 0.0, %v699
    %v716 = vsub.f32 0.0, %v700
    %v717 = vsub.f32 0.0, %v701
    %v718 = vmul.f32 %v702, 1.442695
    %v719 = vpow.pop %v718
    %v720 = vmul.f32 %v703, 1.442695
    %v721 = vpow.pop %v720
    %v722 = vmul.f32 %v704, 1.442695
    %v723 = vpow.pop %v722
    %v724 = vmul.f32 %v705, 1.442695
    %v725 = vpow.pop %v724
    %v726 = vmul.f32 %v706, 1.442695
    %v727 = vpow.pop %v726
    %v728 = vmul.f32 %v707, 1.442695
    %v729 = vpow.pop %v728
    %v730 = vmul.f32 %v708, 1.442695
    %v731 = vpow.pop %v730
    %v732 = vmul.f32 %v709, 1.442695
    %v733 = vpow.pop %v732
    %v734 = vmul.f32 %v710, 1.442695
    %v735 = vpow.pop %v734
    %v736 = vmul.f32 %v711, 1.442695
    %v737 = vpow.pop %v736
    %v738 = vmul.f32 %v712, 1.442695
    %v739 = vpow.pop %v738
    %v740 = vmul.f32 %v713, 1.442695
    %v741 = vpow.pop %v740
    %v742 = vmul.f32 %v714, 1.442695
    %v743 = vpow.pop %v742
    %v744 = vmul.f32 %v715, 1.442695
    %v745 = vpow.pop %v744
    %v746 = vmul.f32 %v716, 1.442695
    %v747 = vpow.pop %v746
    %v748 = vmul.f32 %v717, 1.442695
    %v749 = vpow.pop %v748
    %v750 = vadd.f32 %v719, 1.0
    %v751 = vadd.f32 %v721, 1.0
    %v752 = vadd.f32 %v723, 1.0
    %v753 = vadd.f32 %v725, 1.0
    %v754 = vadd.f32 %v727, 1.0
    %v755 = vadd.f32 %v729, 1.0
    %v756 = vadd.f32 %v731, 1.0
    %v757 = vadd.f32 %v733, 1.0
    %v758 = vadd.f32 %v735, 1.0
    %v759 = vadd.f32 %v737, 1.0
    %v760 = vadd.f32 %v739, 1.0
    %v761 = vadd.f32 %v741, 1.0
    %v762 = vadd.f32 %v743, 1.0
    %v763 = vadd.f32 %v745, 1.0
    %v764 = vadd.f32 %v747, 1.0
    %v765 = vadd.f32 %v749, 1.0
    %v766 = vrcp.pop %v750
    %v767 = vrcp.pop %v751
    %v768 = vrcp.pop %v752
    %v769 = vrcp.pop %v753
    %v770 = vrcp.pop %v754
    %v771 = vrcp.pop %v755
    %v772 = vrcp.pop %v756
    %v773 = vrcp.pop %v757
    %v774 = vrcp.pop %v758
    %v775 = vrcp.pop %v759
    %v776 = vrcp.pop %v760
    %v777 = vrcp.pop %v761
    %v778 = vrcp.pop %v762
    %v779 = vrcp.pop %v763
    %v780 = vrcp.pop %v764
    %v781 = vrcp.pop %v765
    %v782 = vmul.f32 %v67, %v766
    %v783 = vmul.f32 %v68, %v767
    %v784 = vmul.f32 %v69, %v768
    %v785 = vmul.f32 %v70, %v769
    %v786 = vmul.f32 %v71, %v770
    %v787 = vmul.f32 %v72, %v771
    %v788 = vmul.f32 %v73, %v772
    %v789 = vmul.f32 %v74, %v773
    %v790 = vmul.f32 %v75, %v774
    %v791 = vmul.f32 %v76, %v775
    %v792 = vmul.f32 %v77, %v776
    %v793 = vmul.f32 %v78, %v777
    %v794 = vmul.f32 %v79, %v778
    %v795 = vmul.f32 %v80, %v779
    %v796 = vmul.f32 %v81, %v780
    %v797 = vmul.f32 %v82, %v781
    %798 = vst [vmem:[#allocation5] sm:$0xff] %v782
    %799 = vst [vmem:[#allocation5 + $0x8] sm:$0xff] %v783
    %800 = vst [vmem:[#allocation5 + $0x10] sm:$0xff] %v784
    %801 = vst [vmem:[#allocation5 + $0x18] sm:$0xff] %v785
    %802 = vst [vmem:[#allocation5 + $0x20] sm:$0xff] %v786
    %803 = vst [vmem:[#allocation5 + $0x28] sm:$0xff] %v787
    %804 = vst [vmem:[#allocation5 + $0x30] sm:$0xff] %v788
    %805 = vst [vmem:[#allocation5 + $0x38] sm:$0xff] %v789
    %806 = vst [vmem:[#allocation5 + $0x40] sm:$0xff] %v790
    %807 = vst [vmem:[#allocation5 + $0x48] sm:$0xff] %v791
    %808 = vst [vmem:[#allocation5 + $0x50] sm:$0xff] %v792
    %809 = vst [vmem:[#allocation5 + $0x58] sm:$0xff] %v793
    %810 = vst [vmem:[#allocation5 + $0x60] sm:$0xff] %v794
    %811 = vst [vmem:[#allocation5 + $0x68] sm:$0xff] %v795
    %812 = vst [vmem:[#allocation5 + $0x70] sm:$0xff] %v796
    %813 = vst [vmem:[#allocation5 + $0x78] sm:$0xff] %v797
    %s814 = scalar_lea.vmem [#allocation2], 128
    %v815 = vld [vmem:[%s814] sm:$0xff]
    %v816 = vld [vmem:[%s814 + $0x8] sm:$0xff]
    %v817 = vld [vmem:[%s814 + $0x10] sm:$0xff]
    %v818 = vld [vmem:[%s814 + $0x18] sm:$0xff]
    %v819 = vld [vmem:[%s814 + $0x20] sm:$0xff]
    %v820 = vld [vmem:[%s814 + $0x28] sm:$0xff]
    %v821 = vld [vmem:[%s814 + $0x30] sm:$0xff]
    %v822 = vld [vmem:[%s814 + $0x38] sm:$0xff]
    %v823 = vld [vmem:[%s814 + $0x40] sm:$0xff]
    %v824 = vld [vmem:[%s814 + $0x48] sm:$0xff]
    %v825 = vld [vmem:[%s814 + $0x50] sm:$0xff]
    %v826 = vld [vmem:[%s814 + $0x58] sm:$0xff]
    %v827 = vld [vmem:[%s814 + $0x60] sm:$0xff]
    %v828 = vld [vmem:[%s814 + $0x68] sm:$0xff]
    %v829 = vld [vmem:[%s814 + $0x70] sm:$0xff]
    %v830 = vld [vmem:[%s814 + $0x78] sm:$0xff]
    %v831 = vadd.f32 %v815, %v816
    %832 = vadd.xlane.f32.xlu0 %v831
    %v833 = vpop.xlane.xlu0 %832
    %v834 = vadd.f32 %v817, %v818
    %835 = vadd.xlane.f32.xlu0 %v834
    %v836 = vpop.xlane.xlu0 %835
    %v837 = vadd.f32 %v819, %v820
    %838 = vadd.xlane.f32.xlu0 %v837
    %v839 = vpop.xlane.xlu0 %838
    %v840 = vadd.f32 %v821, %v822
    %841 = vadd.xlane.f32.xlu0 %v840
    %v842 = vpop.xlane.xlu0 %841
    %v843 = vadd.f32 %v823, %v824
    %844 = vadd.xlane.f32.xlu0 %v843
    %v845 = vpop.xlane.xlu0 %844
    %v846 = vadd.f32 %v825, %v826
    %847 = vadd.xlane.f32.xlu0 %v846
    %v848 = vpop.xlane.xlu0 %847
    %v849 = vadd.f32 %v827, %v828
    %850 = vadd.xlane.f32.xlu0 %v849
    %v851 = vpop.xlane.xlu0 %850
    %v852 = vadd.f32 %v829, %v830
    %853 = vadd.xlane.f32.xlu0 %v852
    %v854 = vpop.xlane.xlu0 %853
    %v855 = vmul.f32 %v833, 0.00390625
    %v856 = vmul.f32 %v836, 0.00390625
    %v857 = vmul.f32 %v839, 0.00390625
    %v858 = vmul.f32 %v842, 0.00390625
    %v859 = vmul.f32 %v845, 0.00390625
    %v860 = vmul.f32 %v848, 0.00390625
    %v861 = vmul.f32 %v851, 0.00390625
    %v862 = vmul.f32 %v854, 0.00390625
    %863 = vmatprep.subr.mxu0 0.0
    %864 = vmatpush1.msra.mxu0 %v855
    %865 = vmatprep.subr.mxu0 0.0
    %866 = vmatpush1.msra.mxu0 %v856
    %867 = vmatprep.subr.mxu0 0.0
    %868 = vmatpush1.msra.mxu0 %v857
    %869 = vmatprep.subr.mxu0 0.0
    %870 = vmatpush1.msra.mxu0 %v858
    %871 = vmatprep.subr.mxu0 0.0
    %872 = vmatpush1.msra.mxu0 %v859
    %873 = vmatprep.subr.mxu0 0.0
    %874 = vmatpush1.msra.mxu0 %v860
    %875 = vmatprep.subr.mxu0 0.0
    %876 = vmatpush1.msra.mxu0 %v861
    %877 = vmatprep.subr.mxu0 0.0
    %878 = vmatpush1.msra.mxu0 %v862
    %879 = vmatprep.subr.mxu0 0.0
    %880 = vmatpush1.msra.mxu0 0.0
    %881 = vmatprep.subr.mxu0 0.0
    %882 = vmatpush1.msra.mxu0 0.0
    %883 = vmatprep.subr.mxu0 0.0
    %884 = vmatpush1.msra.mxu0 0.0
    %885 = vmatprep.subr.mxu0 0.0
    %886 = vmatpush1.msra.mxu0 0.0
    %887 = vmatprep.subr.mxu0 0.0
    %888 = vmatpush1.msra.mxu0 0.0
    %889 = vmatprep.subr.mxu0 0.0
    %890 = vmatpush1.msra.mxu0 0.0
    %891 = vmatprep.subr.mxu0 0.0
    %892 = vmatpush1.msra.mxu0 0.0
    %893 = vmatprep.subr.mxu0 0.0
    %894 = vmatpush1.msra.mxu0 0.0
    %895 = vmatprep.subr.mxu0 0.0
    %896 = vmatpush1.msra.mxu0 0.0
    %897 = vmatprep.subr.mxu0 0.0
    %898 = vmatpush1.msra.mxu0 0.0
    %899 = vmatprep.subr.mxu0 0.0
    %900 = vmatpush1.msra.mxu0 0.0
    %901 = vmatprep.subr.mxu0 0.0
    %902 = vmatpush1.msra.mxu0 0.0
    %903 = vmatprep.subr.mxu0 0.0
    %904 = vmatpush1.msra.mxu0 0.0
    %905 = vmatprep.subr.mxu0 0.0
    %906 = vmatpush1.msra.mxu0 0.0
    %907 = vmatprep.subr.mxu0 0.0
    %908 = vmatpush1.msra.mxu0 0.0
    %909 = vmatprep.subr.mxu0 0.0
    %910 = vmatpush1.msra.mxu0 0.0
    %911 = vmatprep.subr.mxu0 0.0
    %912 = vmatpush1.msra.mxu0 0.0
    %913 = vmatprep.subr.mxu0 0.0
    %914 = vmatpush1.msra.mxu0 0.0
    %915 = vmatprep.subr.mxu0 0.0
    %916 = vmatpush1.msra.mxu0 0.0
    %917 = vmatprep.subr.mxu0 0.0
    %918 = vmatpush1.msra.mxu0 0.0
    %919 = vmatprep.subr.mxu0 0.0
    %920 = vmatpush1.msra.mxu0 0.0
    %921 = vmatprep.subr.mxu0 0.0
    %922 = vmatpush1.msra.mxu0 0.0
    %923 = vmatprep.subr.mxu0 0.0
    %924 = vmatpush1.msra.mxu0 0.0
    %925 = vmatprep.subr.mxu0 0.0
    %926 = vmatpush1.msra.mxu0 0.0
    %927 = vmatprep.mubr.f32.mxu0 0.0
    %928 = vmatmul.mubr.f32.gmra.mrb[0].mxu0 %v117
    %v929 = vpop.f32.mrb[0].mxu0
    %v930 = vadd.f32 %v47, %v929
    %v931 = vpop.f32.mrb[0].mxu0
    %932 = vdwg.mxu0
    %v933 = vmax.f32 %v930, 0.0
    %934 = vmatprep.subr.mxu0 0.0
    %935 = vmatpush1.msra.mxu0 %v933
    %936 = vmatprep.subr.mxu0 0.0
    %937 = vmatpush1.msra.mxu0 0.0
    %938 = vmatprep.subr.mxu0 0.0
    %939 = vmatpush1.msra.mxu0 0.0
    %940 = vmatprep.subr.mxu0 0.0
    %941 = vmatpush1.msra.mxu0 0.0
    %942 = vmatprep.subr.mxu0 0.0
    %943 = vmatpush1.msra.mxu0 0.0
    %944 = vmatprep.subr.mxu0 0.0
    %945 = vmatpush1.msra.mxu0 0.0
    %946 = vmatprep.subr.mxu0 0.0
    %947 = vmatpush1.msra.mxu0 0.0
    %948 = vmatprep.subr.mxu0 0.0
    %949 = vmatpush1.msra.mxu0 0.0
    %950 = vmatprep.subr.mxu0 0.0
    %951 = vmatpush1.msra.mxu0 0.0
    %952 = vmatprep.subr.mxu0 0.0
    %953 = vmatpush1.msra.mxu0 0.0
    %954 = vmatprep.subr.mxu0 0.0
    %955 = vmatpush1.msra.mxu0 0.0
    %956 = vmatprep.subr.mxu0 0.0
    %957 = vmatpush1.msra.mxu0 0.0
    %958 = vmatprep.subr.mxu0 0.0
    %959 = vmatpush1.msra.mxu0 0.0
    %960 = vmatprep.subr.mxu0 0.0
    %961 = vmatpush1.msra.mxu0 0.0
    %962 = vmatprep.subr.mxu0 0.0
    %963 = vmatpush1.msra.mxu0 0.0
    %964 = vmatprep.subr.mxu0 0.0
    %965 = vmatpush1.msra.mxu0 0.0
    %966 = vmatprep.subr.mxu0 0.0
    %967 = vmatpush1.msra.mxu0 0.0
    %968 = vmatprep.subr.mxu0 0.0
    %969 = vmatpush1.msra.mxu0 0.0
    %970 = vmatprep.subr.mxu0 0.0
    %971 = vmatpush1.msra.mxu0 0.0
    %972 = vmatprep.subr.mxu0 0.0
    %973 = vmatpush1.msra.mxu0 0.0
    %974 = vmatprep.subr.mxu0 0.0
    %975 = vmatpush1.msra.mxu0 0.0
    %976 = vmatprep.subr.mxu0 0.0
    %977 = vmatpush1.msra.mxu0 0.0
    %978 = vmatprep.subr.mxu0 0.0
    %979 = vmatpush1.msra.mxu0 0.0
    %980 = vmatprep.subr.mxu0 0.0
    %981 = vmatpush1.msra.mxu0 0.0
    %982 = vmatprep.subr.mxu0 0.0
    %983 = vmatpush1.msra.mxu0 0.0
    %984 = vmatprep.subr.mxu0 0.0
    %985 = vmatpush1.msra.mxu0 0.0
    %986 = vmatprep.subr.mxu0 0.0
    %987 = vmatpush1.msra.mxu0 0.0
    %988 = vmatprep.subr.mxu0 0.0
    %989 = vmatpush1.msra.mxu0 0.0
    %990 = vmatprep.subr.mxu0 0.0
    %991 = vmatpush1.msra.mxu0 0.0
    %992 = vmatprep.subr.mxu0 0.0
    %993 = vmatpush1.msra.mxu0 0.0
    %994 = vmatprep.subr.mxu0 0.0
    %995 = vmatpush1.msra.mxu0 0.0
    %996 = vmatprep.subr.mxu0 0.0
    %997 = vmatpush1.msra.mxu0 0.0
    %998 = vmatprep.mubr.f32.mxu0 0.0
    %999 = vmatmul.mubr.f32.gmra.mrb[0].mxu0 %v192
    %v1000 = vpop.f32.mrb[0].mxu0
    %v1001 = vadd.f32 %v56, %v1000
    %v1002 = vpop.f32.mrb[0].mxu0
    %1003 = vmatprep.mubr.f32.mxu0 0.0
    %1004 = vmatmul.mubr.f32.gmra.mrb[0].mxu0 %v195
    %v1005 = vpop.f32.mrb[0].mxu0
    %v1006 = vadd.f32 %v57, %v1005
    %v1007 = vpop.f32.mrb[0].mxu0
    %1008 = vmatprep.mubr.f32.mxu0 0.0
    %1009 = vmatmul.mubr.f32.gmra.mrb[0].mxu0 %v198
    %v1010 = vpop.f32.mrb[0].mxu0
    %v1011 = vadd.f32 %v58, %v1010
    %v1012 = vpop.f32.mrb[0].mxu0
    %1013 = vmatprep.mubr.f32.mxu0 0.0
    %1014 = vmatmul.mubr.f32.gmra.mrb[0].mxu0 %v201
    %v1015 = vpop.f32.mrb[0].mxu0
    %v1016 = vadd.f32 %v59, %v1015
    %v1017 = vpop.f32.mrb[0].mxu0
    %1018 = vmatprep.mubr.f32.mxu0 0.0
    %1019 = vmatmul.mubr.f32.gmra.mrb[0].mxu0 %v204
    %v1020 = vpop.f32.mrb[0].mxu0
    %v1021 = vadd.f32 %v60, %v1020
    %v1022 = vpop.f32.mrb[0].mxu0
    %1023 = vmatprep.mubr.f32.mxu0 0.0
    %1024 = vmatmul.mubr.f32.gmra.mrb[0].mxu0 %v207
    %v1025 = vpop.f32.mrb[0].mxu0
    %v1026 = vadd.f32 %v61, %v1025
    %v1027 = vpop.f32.mrb[0].mxu0
    %1028 = vmatprep.mubr.f32.mxu0 0.0
    %1029 = vmatmul.mubr.f32.gmra.mrb[0].mxu0 %v210
    %v1030 = vpop.f32.mrb[0].mxu0
    %v1031 = vadd.f32 %v62, %v1030
    %v1032 = vpop.f32.mrb[0].mxu0
    %1033 = vmatprep.mubr.f32.mxu0 0.0
    %1034 = vmatmul.mubr.f32.gmra.mrb[0].mxu0 %v213
    %v1035 = vpop.f32.mrb[0].mxu0
    %v1036 = vadd.f32 %v63, %v1035
    %v1037 = vpop.f32.mrb[0].mxu0
    %1038 = vdwg.mxu0
    %1039 = vrot.lane.b32.xlu0 %v815, 1
    %v1040 = vpop.permute.xlu0 %1039
    %1041 = vrot.lane.b32.xlu0 %v817, 1
    %v1042 = vpop.permute.xlu0 %1041
    %1043 = vrot.lane.b32.xlu0 %v819, 1
    %v1044 = vpop.permute.xlu0 %1043
    %1045 = vrot.lane.b32.xlu0 %v821, 1
    %v1046 = vpop.permute.xlu0 %1045
    %1047 = vrot.lane.b32.xlu0 %v823, 1
    %v1048 = vpop.permute.xlu0 %1047
    %1049 = vrot.lane.b32.xlu0 %v825, 1
    %v1050 = vpop.permute.xlu0 %1049
    %1051 = vrot.lane.b32.xlu0 %v827, 1
    %v1052 = vpop.permute.xlu0 %1051
    %1053 = vrot.lane.b32.xlu0 %v829, 1
    %v1054 = vpop.permute.xlu0 %1053
    %1055 = vrot.lane.b32.xlu0 %v816, 1
    %v1056 = vpop.permute.xlu0 %1055
    %1057 = vrot.lane.b32.xlu0 %v818, 1
    %v1058 = vpop.permute.xlu0 %1057
    %1059 = vrot.lane.b32.xlu0 %v820, 1
    %v1060 = vpop.permute.xlu0 %1059
    %1061 = vrot.lane.b32.xlu0 %v822, 1
    %v1062 = vpop.permute.xlu0 %1061
    %1063 = vrot.lane.b32.xlu0 %v824, 1
    %v1064 = vpop.permute.xlu0 %1063
    %1065 = vrot.lane.b32.xlu0 %v826, 1
    %v1066 = vpop.permute.xlu0 %1065
    %1067 = vrot.lane.b32.xlu0 %v828, 1
    %v1068 = vpop.permute.xlu0 %1067
    %1069 = vrot.lane.b32.xlu0 %v830, 1
    %v1070 = vpop.permute.xlu0 %1069
    %v1071 = vsel %vm354, %v1040, %v1056
    %v1072 = vsel %vm354, %v1042, %v1058
    %v1073 = vsel %vm354, %v1044, %v1060
    %v1074 = vsel %vm354, %v1046, %v1062
    %v1075 = vsel %vm354, %v1048, %v1064
    %v1076 = vsel %vm354, %v1050, %v1066
    %v1077 = vsel %vm354, %v1052, %v1068
    %v1078 = vsel %vm354, %v1054, %v1070
    %v1079 = vsel %vm354, %v1056, %v1040
    %v1080 = vsel %vm354, %v1058, %v1042
    %v1081 = vsel %vm354, %v1060, %v1044
    %v1082 = vsel %vm354, %v1062, %v1046
    %v1083 = vsel %vm354, %v1064, %v1048
    %v1084 = vsel %vm354, %v1066, %v1050
    %v1085 = vsel %vm354, %v1068, %v1052
    %v1086 = vsel %vm354, %v1070, %v1054
    %v1087 = vsel %vm373, %v1079, 0.0
    %v1088 = vsel %vm374, %v1071, 0.0
    %v1089 = vsel %vm373, %v1080, 0.0
    %v1090 = vsel %vm374, %v1072, 0.0
    %v1091 = vsel %vm373, %v1081, 0.0
    %v1092 = vsel %vm374, %v1073, 0.0
    %v1093 = vsel %vm373, %v1082, 0.0
    %v1094 = vsel %vm374, %v1074, 0.0
    %v1095 = vsel %vm373, %v1083, 0.0
    %v1096 = vsel %vm374, %v1075, 0.0
    %v1097 = vsel %vm373, %v1084, 0.0
    %v1098 = vsel %vm374, %v1076, 0.0
    %v1099 = vsel %vm373, %v1085, 0.0
    %v1100 = vsel %vm374, %v1077, 0.0
    %v1101 = vsel %vm373, %v1086, 0.0
    %v1102 = vsel %vm374, %v1078, 0.0
    %1103 = vrot.lane.b32.xlu0 %v815, 127
    %v1104 = vpop.permute.xlu0 %1103
    %1105 = vrot.lane.b32.xlu0 %v817, 127
    %v1106 = vpop.permute.xlu0 %1105
    %1107 = vrot.lane.b32.xlu0 %v819, 127
    %v1108 = vpop.permute.xlu0 %1107
    %1109 = vrot.lane.b32.xlu0 %v821, 127
    %v1110 = vpop.permute.xlu0 %1109
    %1111 = vrot.lane.b32.xlu0 %v823, 127
    %v1112 = vpop.permute.xlu0 %1111
    %1113 = vrot.lane.b32.xlu0 %v825, 127
    %v1114 = vpop.permute.xlu0 %1113
    %1115 = vrot.lane.b32.xlu0 %v827, 127
    %v1116 = vpop.permute.xlu0 %1115
    %1117 = vrot.lane.b32.xlu0 %v829, 127
    %v1118 = vpop.permute.xlu0 %1117
    %1119 = vrot.lane.b32.xlu0 %v816, 127
    %v1120 = vpop.permute.xlu0 %1119
    %1121 = vrot.lane.b32.xlu0 %v818, 127
    %v1122 = vpop.permute.xlu0 %1121
    %1123 = vrot.lane.b32.xlu0 %v820, 127
    %v1124 = vpop.permute.xlu0 %1123
    %1125 = vrot.lane.b32.xlu0 %v822, 127
    %v1126 = vpop.permute.xlu0 %1125
    %1127 = vrot.lane.b32.xlu0 %v824, 127
    %v1128 = vpop.permute.xlu0 %1127
    %1129 = vrot.lane.b32.xlu0 %v826, 127
    %v1130 = vpop.permute.xlu0 %1129
    %1131 = vrot.lane.b32.xlu0 %v828, 127
    %v1132 = vpop.permute.xlu0 %1131
    %1133 = vrot.lane.b32.xlu0 %v830, 127
    %v1134 = vpop.permute.xlu0 %1133
    %v1135 = vsel %vm425, %v1104, %v1120
    %v1136 = vsel %vm425, %v1106, %v1122
    %v1137 = vsel %vm425, %v1108, %v1124
    %v1138 = vsel %vm425, %v1110, %v1126
    %v1139 = vsel %vm425, %v1112, %v1128
    %v1140 = vsel %vm425, %v1114, %v1130
    %v1141 = vsel %vm425, %v1116, %v1132
    %v1142 = vsel %vm425, %v1118, %v1134
    %v1143 = vsel %vm425, %v1120, %v1104
    %v1144 = vsel %vm425, %v1122, %v1106
    %v1145 = vsel %vm425, %v1124, %v1108
    %v1146 = vsel %vm425, %v1126, %v1110
    %v1147 = vsel %vm425, %v1128, %v1112
    %v1148 = vsel %vm425, %v1130, %v1114
    %v1149 = vsel %vm425, %v1132, %v1116
    %v1150 = vsel %vm425, %v1134, %v1118
    %v1151 = vsel %vm444, %v1135, 0.0
    %v1152 = vsel %vm445, %v1143, 0.0
    %v1153 = vsel %vm444, %v1136, 0.0
    %v1154 = vsel %vm445, %v1144, 0.0
    %v1155 = vsel %vm444, %v1137, 0.0
    %v1156 = vsel %vm445, %v1145, 0.0
    %v1157 = vsel %vm444, %v1138, 0.0
    %v1158 = vsel %vm445, %v1146, 0.0
    %v1159 = vsel %vm444, %v1139, 0.0
    %v1160 = vsel %vm445, %v1147, 0.0
    %v1161 = vsel %vm444, %v1140, 0.0
    %v1162 = vsel %vm445, %v1148, 0.0
    %v1163 = vsel %vm444, %v1141, 0.0
    %v1164 = vsel %vm445, %v1149, 0.0
    %v1165 = vsel %vm444, %v1142, 0.0
    %v1166 = vsel %vm445, %v1150, 0.0
    %v1167 = vmul.f32 %v465, %v1087
    %v1168 = vmul.f32 %v465, %v1088
    %v1169 = vmul.f32 %v470, %v1089
    %v1170 = vmul.f32 %v470, %v1090
    %v1171 = vmul.f32 %v475, %v1091
    %v1172 = vmul.f32 %v475, %v1092
    %v1173 = vmul.f32 %v480, %v1093
    %v1174 = vmul.f32 %v480, %v1094
    %v1175 = vmul.f32 %v485, %v1095
    %v1176 = vmul.f32 %v485, %v1096
    %v1177 = vmul.f32 %v490, %v1097
    %v1178 = vmul.f32 %v490, %v1098
    %v1179 = vmul.f32 %v495, %v1099
    %v1180 = vmul.f32 %v495, %v1100
    %v1181 = vmul.f32 %v500, %v1101
    %v1182 = vmul.f32 %v500, %v1102
    %v1183 = vmul.f32 %v520, %v815
    %v1184 = vmul.f32 %v520, %v816
    %v1185 = vmul.f32 %v524, %v817
    %v1186 = vmul.f32 %v524, %v818
    %v1187 = vmul.f32 %v528, %v819
    %v1188 = vmul.f32 %v528, %v820
    %v1189 = vmul.f32 %v532, %v821
    %v1190 = vmul.f32 %v532, %v822
    %v1191 = vmul.f32 %v536, %v823
    %v1192 = vmul.f32 %v536, %v824
    %v1193 = vmul.f32 %v540, %v825
    %v1194 = vmul.f32 %v540, %v826
    %v1195 = vmul.f32 %v544, %v827
    %v1196 = vmul.f32 %v544, %v828
    %v1197 = vmul.f32 %v548, %v829
    %v1198 = vmul.f32 %v548, %v830
    %v1199 = vadd.f32 %v1167, %v1183
    %v1200 = vadd.f32 %v1168, %v1184
    %v1201 = vadd.f32 %v1169, %v1185
    %v1202 = vadd.f32 %v1170, %v1186
    %v1203 = vadd.f32 %v1171, %v1187
    %v1204 = vadd.f32 %v1172, %v1188
    %v1205 = vadd.f32 %v1173, %v1189
    %v1206 = vadd.f32 %v1174, %v1190
    %v1207 = vadd.f32 %v1175, %v1191
    %v1208 = vadd.f32 %v1176, %v1192
    %v1209 = vadd.f32 %v1177, %v1193
    %v1210 = vadd.f32 %v1178, %v1194
    %v1211 = vadd.f32 %v1179, %v1195
    %v1212 = vadd.f32 %v1180, %v1196
    %v1213 = vadd.f32 %v1181, %v1197
    %v1214 = vadd.f32 %v1182, %v1198
    %v1215 = vmul.f32 %v584, %v1151
    %v1216 = vmul.f32 %v584, %v1152
    %v1217 = vmul.f32 %v588, %v1153
    %v1218 = vmul.f32 %v588, %v1154
    %v1219 = vmul.f32 %v592, %v1155
    %v1220 = vmul.f32 %v592, %v1156
    %v1221 = vmul.f32 %v596, %v1157
    %v1222 = vmul.f32 %v596, %v1158
    %v1223 = vmul.f32 %v600, %v1159
    %v1224 = vmul.f32 %v600, %v1160
    %v1225 = vmul.f32 %v604, %v1161
    %v1226 = vmul.f32 %v604, %v1162
    %v1227 = vmul.f32 %v608, %v1163
    %v1228 = vmul.f32 %v608, %v1164
    %v1229 = vmul.f32 %v612, %v1165
    %v1230 = vmul.f32 %v612, %v1166
    %v1231 = vadd.f32 %v1199, %v1215
    %v1232 = vadd.f32 %v1200, %v1216
    %v1233 = vadd.f32 %v1201, %v1217
    %v1234 = vadd.f32 %v1202, %v1218
    %v1235 = vadd.f32 %v1203, %v1219
    %v1236 = vadd.f32 %v1204, %v1220
    %v1237 = vadd.f32 %v1205, %v1221
    %v1238 = vadd.f32 %v1206, %v1222
    %v1239 = vadd.f32 %v1207, %v1223
    %v1240 = vadd.f32 %v1208, %v1224
    %v1241 = vadd.f32 %v1209, %v1225
    %v1242 = vadd.f32 %v1210, %v1226
    %v1243 = vadd.f32 %v1211, %v1227
    %v1244 = vadd.f32 %v1212, %v1228
    %v1245 = vadd.f32 %v1213, %v1229
    %v1246 = vadd.f32 %v1214, %v1230
    %1248 = vset.pattern.permute.xlu0 0
    %1249 = vperm.xlu0 %1248, %v1001
    %v1250 = vpop.permute.xlu0 %1249
    %1253 = vset.pattern.permute.xlu0 0
    %1254 = vperm.xlu0 %1253, %v1006
    %v1255 = vpop.permute.xlu0 %1254
    %1258 = vset.pattern.permute.xlu0 0
    %1259 = vperm.xlu0 %1258, %v1011
    %v1260 = vpop.permute.xlu0 %1259
    %1263 = vset.pattern.permute.xlu0 0
    %1264 = vperm.xlu0 %1263, %v1016
    %v1265 = vpop.permute.xlu0 %1264
    %1268 = vset.pattern.permute.xlu0 0
    %1269 = vperm.xlu0 %1268, %v1021
    %v1270 = vpop.permute.xlu0 %1269
    %1273 = vset.pattern.permute.xlu0 0
    %1274 = vperm.xlu0 %1273, %v1026
    %v1275 = vpop.permute.xlu0 %1274
    %1278 = vset.pattern.permute.xlu0 0
    %1279 = vperm.xlu0 %1278, %v1031
    %v1280 = vpop.permute.xlu0 %1279
    %1283 = vset.pattern.permute.xlu0 0
    %1284 = vperm.xlu0 %1283, %v1036
    %v1285 = vpop.permute.xlu0 %1284
    %v1287 = vadd.f32 %v1231, %v1250
    %v1288 = vadd.f32 %v1232, %v1250
    %v1289 = vadd.f32 %v1233, %v1255
    %v1290 = vadd.f32 %v1234, %v1255
    %v1291 = vadd.f32 %v1235, %v1260
    %v1292 = vadd.f32 %v1236, %v1260
    %v1293 = vadd.f32 %v1237, %v1265
    %v1294 = vadd.f32 %v1238, %v1265
    %v1295 = vadd.f32 %v1239, %v1270
    %v1296 = vadd.f32 %v1240, %v1270
    %v1297 = vadd.f32 %v1241, %v1275
    %v1298 = vadd.f32 %v1242, %v1275
    %v1299 = vadd.f32 %v1243, %v1280
    %v1300 = vadd.f32 %v1244, %v1280
    %v1301 = vadd.f32 %v1245, %v1285
    %v1302 = vadd.f32 %v1246, %v1285
    %v1303 = vsub.f32 0.0, %v1287
    %v1304 = vsub.f32 0.0, %v1288
    %v1305 = vsub.f32 0.0, %v1289
    %v1306 = vsub.f32 0.0, %v1290
    %v1307 = vsub.f32 0.0, %v1291
    %v1308 = vsub.f32 0.0, %v1292
    %v1309 = vsub.f32 0.0, %v1293
    %v1310 = vsub.f32 0.0, %v1294
    %v1311 = vsub.f32 0.0, %v1295
    %v1312 = vsub.f32 0.0, %v1296
    %v1313 = vsub.f32 0.0, %v1297
    %v1314 = vsub.f32 0.0, %v1298
    %v1315 = vsub.f32 0.0, %v1299
    %v1316 = vsub.f32 0.0, %v1300
    %v1317 = vsub.f32 0.0, %v1301
    %v1318 = vsub.f32 0.0, %v1302
    %v1319 = vmul.f32 %v1303, 1.442695
    %v1320 = vpow.pop %v1319
    %v1321 = vmul.f32 %v1304, 1.442695
    %v1322 = vpow.pop %v1321
    %v1323 = vmul.f32 %v1305, 1.442695
    %v1324 = vpow.pop %v1323
    %v1325 = vmul.f32 %v1306, 1.442695
    %v1326 = vpow.pop %v1325
    %v1327 = vmul.f32 %v1307, 1.442695
    %v1328 = vpow.pop %v1327
    %v1329 = vmul.f32 %v1308, 1.442695
    %v1330 = vpow.pop %v1329
    %v1331 = vmul.f32 %v1309, 1.442695
    %v1332 = vpow.pop %v1331
    %v1333 = vmul.f32 %v1310, 1.442695
    %v1334 = vpow.pop %v1333
    %v1335 = vmul.f32 %v1311, 1.442695
    %v1336 = vpow.pop %v1335
    %v1337 = vmul.f32 %v1312, 1.442695
    %v1338 = vpow.pop %v1337
    %v1339 = vmul.f32 %v1313, 1.442695
    %v1340 = vpow.pop %v1339
    %v1341 = vmul.f32 %v1314, 1.442695
    %v1342 = vpow.pop %v1341
    %v1343 = vmul.f32 %v1315, 1.442695
    %v1344 = vpow.pop %v1343
    %v1345 = vmul.f32 %v1316, 1.442695
    %v1346 = vpow.pop %v1345
    %v1347 = vmul.f32 %v1317, 1.442695
    %v1348 = vpow.pop %v1347
    %v1349 = vmul.f32 %v1318, 1.442695
    %v1350 = vpow.pop %v1349
    %v1351 = vadd.f32 %v1320, 1.0
    %v1352 = vadd.f32 %v1322, 1.0
    %v1353 = vadd.f32 %v1324, 1.0
    %v1354 = vadd.f32 %v1326, 1.0
    %v1355 = vadd.f32 %v1328, 1.0
    %v1356 = vadd.f32 %v1330, 1.0
    %v1357 = vadd.f32 %v1332, 1.0
    %v1358 = vadd.f32 %v1334, 1.0
    %v1359 = vadd.f32 %v1336, 1.0
    %v1360 = vadd.f32 %v1338, 1.0
    %v1361 = vadd.f32 %v1340, 1.0
    %v1362 = vadd.f32 %v1342, 1.0
    %v1363 = vadd.f32 %v1344, 1.0
    %v1364 = vadd.f32 %v1346, 1.0
    %v1365 = vadd.f32 %v1348, 1.0
    %v1366 = vadd.f32 %v1350, 1.0
    %v1367 = vrcp.pop %v1351
    %v1368 = vrcp.pop %v1352
    %v1369 = vrcp.pop %v1353
    %v1370 = vrcp.pop %v1354
    %v1371 = vrcp.pop %v1355
    %v1372 = vrcp.pop %v1356
    %v1373 = vrcp.pop %v1357
    %v1374 = vrcp.pop %v1358
    %v1375 = vrcp.pop %v1359
    %v1376 = vrcp.pop %v1360
    %v1377 = vrcp.pop %v1361
    %v1378 = vrcp.pop %v1362
    %v1379 = vrcp.pop %v1363
    %v1380 = vrcp.pop %v1364
    %v1381 = vrcp.pop %v1365
    %v1382 = vrcp.pop %v1366
    %v1383 = vmul.f32 %v815, %v1367
    %v1384 = vmul.f32 %v816, %v1368
    %v1385 = vmul.f32 %v817, %v1369
    %v1386 = vmul.f32 %v818, %v1370
    %v1387 = vmul.f32 %v819, %v1371
    %v1388 = vmul.f32 %v820, %v1372
    %v1389 = vmul.f32 %v821, %v1373
    %v1390 = vmul.f32 %v822, %v1374
    %v1391 = vmul.f32 %v823, %v1375
    %v1392 = vmul.f32 %v824, %v1376
    %v1393 = vmul.f32 %v825, %v1377
    %v1394 = vmul.f32 %v826, %v1378
    %v1395 = vmul.f32 %v827, %v1379
    %v1396 = vmul.f32 %v828, %v1380
    %v1397 = vmul.f32 %v829, %v1381
    %v1398 = vmul.f32 %v830, %v1382
    %s1399 = scalar_lea.vmem [#allocation5], 128
    %1400 = vst [vmem:[%s1399] sm:$0xff] %v1383
    %1401 = vst [vmem:[%s1399 + $0x8] sm:$0xff] %v1384
    %1402 = vst [vmem:[%s1399 + $0x10] sm:$0xff] %v1385
    %1403 = vst [vmem:[%s1399 + $0x18] sm:$0xff] %v1386
    %1404 = vst [vmem:[%s1399 + $0x20] sm:$0xff] %v1387
    %1405 = vst [vmem:[%s1399 + $0x28] sm:$0xff] %v1388
    %1406 = vst [vmem:[%s1399 + $0x30] sm:$0xff] %v1389
    %1407 = vst [vmem:[%s1399 + $0x38] sm:$0xff] %v1390
    %1408 = vst [vmem:[%s1399 + $0x40] sm:$0xff] %v1391
    %1409 = vst [vmem:[%s1399 + $0x48] sm:$0xff] %v1392
    %1410 = vst [vmem:[%s1399 + $0x50] sm:$0xff] %v1393
    %1411 = vst [vmem:[%s1399 + $0x58] sm:$0xff] %v1394
    %1412 = vst [vmem:[%s1399 + $0x60] sm:$0xff] %v1395
    %1413 = vst [vmem:[%s1399 + $0x68] sm:$0xff] %v1396
    %1414 = vst [vmem:[%s1399 + $0x70] sm:$0xff] %v1397
    %1415 = vst [vmem:[%s1399 + $0x78] sm:$0xff] %v1398
    %s1416 = scalar_lea.vmem [#allocation2], 256
    %v1417 = vld [vmem:[%s1416] sm:$0xff]
    %v1418 = vld [vmem:[%s1416 + $0x8] sm:$0xff]
    %v1419 = vld [vmem:[%s1416 + $0x10] sm:$0xff]
    %v1420 = vld [vmem:[%s1416 + $0x18] sm:$0xff]
    %v1421 = vld [vmem:[%s1416 + $0x20] sm:$0xff]
    %v1422 = vld [vmem:[%s1416 + $0x28] sm:$0xff]
    %v1423 = vld [vmem:[%s1416 + $0x30] sm:$0xff]
    %v1424 = vld [vmem:[%s1416 + $0x38] sm:$0xff]
    %v1425 = vld [vmem:[%s1416 + $0x40] sm:$0xff]
    %v1426 = vld [vmem:[%s1416 + $0x48] sm:$0xff]
    %v1427 = vld [vmem:[%s1416 + $0x50] sm:$0xff]
    %v1428 = vld [vmem:[%s1416 + $0x58] sm:$0xff]
    %v1429 = vld [vmem:[%s1416 + $0x60] sm:$0xff]
    %v1430 = vld [vmem:[%s1416 + $0x68] sm:$0xff]
    %v1431 = vld [vmem:[%s1416 + $0x70] sm:$0xff]
    %v1432 = vld [vmem:[%s1416 + $0x78] sm:$0xff]
    %v1433 = vadd.f32 %v1417, %v1418
    %1434 = vadd.xlane.f32.xlu0 %v1433
    %v1435 = vpop.xlane.xlu0 %1434
    %v1436 = vadd.f32 %v1419, %v1420
    %1437 = vadd.xlane.f32.xlu0 %v1436
    %v1438 = vpop.xlane.xlu0 %1437
    %v1439 = vadd.f32 %v1421, %v1422
    %1440 = vadd.xlane.f32.xlu0 %v1439
    %v1441 = vpop.xlane.xlu0 %1440
    %v1442 = vadd.f32 %v1423, %v1424
    %1443 = vadd.xlane.f32.xlu0 %v1442
    %v1444 = vpop.xlane.xlu0 %1443
    %v1445 = vadd.f32 %v1425, %v1426
    %1446 = vadd.xlane.f32.xlu0 %v1445
    %v1447 = vpop.xlane.xlu0 %1446
    %v1448 = vadd.f32 %v1427, %v1428
    %1449 = vadd.xlane.f32.xlu0 %v1448
    %v1450 = vpop.xlane.xlu0 %1449
    %v1451 = vadd.f32 %v1429, %v1430
    %1452 = vadd.xlane.f32.xlu0 %v1451
    %v1453 = vpop.xlane.xlu0 %1452
    %v1454 = vadd.f32 %v1431, %v1432
    %1455 = vadd.xlane.f32.xlu0 %v1454
    %v1456 = vpop.xlane.xlu0 %1455
    %v1457 = vmul.f32 %v1435, 0.00390625
    %v1458 = vmul.f32 %v1438, 0.00390625
    %v1459 = vmul.f32 %v1441, 0.00390625
    %v1460 = vmul.f32 %v1444, 0.00390625
    %v1461 = vmul.f32 %v1447, 0.00390625
    %v1462 = vmul.f32 %v1450, 0.00390625
    %v1463 = vmul.f32 %v1453, 0.00390625
    %v1464 = vmul.f32 %v1456, 0.00390625
    %1465 = vmatprep.subr.mxu0 0.0
    %1466 = vmatpush1.msra.mxu0 %v1457
    %1467 = vmatprep.subr.mxu0 0.0
    %1468 = vmatpush1.msra.mxu0 %v1458
    %1469 = vmatprep.subr.mxu0 0.0
    %1470 = vmatpush1.msra.mxu0 %v1459
    %1471 = vmatprep.subr.mxu0 0.0
    %1472 = vmatpush1.msra.mxu0 %v1460
    %1473 = vmatprep.subr.mxu0 0.0
    %1474 = vmatpush1.msra.mxu0 %v1461
    %1475 = vmatprep.subr.mxu0 0.0
    %1476 = vmatpush1.msra.mxu0 %v1462
    %1477 = vmatprep.subr.mxu0 0.0
    %1478 = vmatpush1.msra.mxu0 %v1463
    %1479 = vmatprep.subr.mxu0 0.0
    %1480 = vmatpush1.msra.mxu0 %v1464
    %1481 = vmatprep.subr.mxu0 0.0
    %1482 = vmatpush1.msra.mxu0 0.0
    %1483 = vmatprep.subr.mxu0 0.0
    %1484 = vmatpush1.msra.mxu0 0.0
    %1485 = vmatprep.subr.mxu0 0.0
    %1486 = vmatpush1.msra.mxu0 0.0
    %1487 = vmatprep.subr.mxu0 0.0
    %1488 = vmatpush1.msra.mxu0 0.0
    %1489 = vmatprep.subr.mxu0 0.0
    %1490 = vmatpush1.msra.mxu0 0.0
    %1491 = vmatprep.subr.mxu0 0.0
    %1492 = vmatpush1.msra.mxu0 0.0
    %1493 = vmatprep.subr.mxu0 0.0
    %1494 = vmatpush1.msra.mxu0 0.0
    %1495 = vmatprep.subr.mxu0 0.0
    %1496 = vmatpush1.msra.mxu0 0.0
    %1497 = vmatprep.subr.mxu0 0.0
    %1498 = vmatpush1.msra.mxu0 0.0
    %1499 = vmatprep.subr.mxu0 0.0
    %1500 = vmatpush1.msra.mxu0 0.0
    %1501 = vmatprep.subr.mxu0 0.0
    %1502 = vmatpush1.msra.mxu0 0.0
    %1503 = vmatprep.subr.mxu0 0.0
    %1504 = vmatpush1.msra.mxu0 0.0
    %1505 = vmatprep.subr.mxu0 0.0
    %1506 = vmatpush1.msra.mxu0 0.0
    %1507 = vmatprep.subr.mxu0 0.0
    %1508 = vmatpush1.msra.mxu0 0.0
    %1509 = vmatprep.subr.mxu0 0.0
    %1510 = vmatpush1.msra.mxu0 0.0
    %1511 = vmatprep.subr.mxu0 0.0
    %1512 = vmatpush1.msra.mxu0 0.0
    %1513 = vmatprep.subr.mxu0 0.0
    %1514 = vmatpush1.msra.mxu0 0.0
    %1515 = vmatprep.subr.mxu0 0.0
    %1516 = vmatpush1.msra.mxu0 0.0
    %1517 = vmatprep.subr.mxu0 0.0
    %1518 = vmatpush1.msra.mxu0 0.0
    %1519 = vmatprep.subr.mxu0 0.0
    %1520 = vmatpush1.msra.mxu0 0.0
    %1521 = vmatprep.subr.mxu0 0.0
    %1522 = vmatpush1.msra.mxu0 0.0
    %1523 = vmatprep.subr.mxu0 0.0
    %1524 = vmatpush1.msra.mxu0 0.0
    %1525 = vmatprep.subr.mxu0 0.0
    %1526 = vmatpush1.msra.mxu0 0.0
    %1527 = vmatprep.subr.mxu0 0.0
    %1528 = vmatpush1.msra.mxu0 0.0
    %1529 = vmatprep.mubr.f32.mxu0 0.0
    %1530 = vmatmul.mubr.f32.gmra.mrb[0].mxu0 %v117
    %v1531 = vpop.f32.mrb[0].mxu0
    %v1532 = vadd.f32 %v47, %v1531
    %v1533 = vpop.f32.mrb[0].mxu0
    %1534 = vdwg.mxu0
    %v1535 = vmax.f32 %v1532, 0.0
    %1536 = vmatprep.subr.mxu0 0.0
    %1537 = vmatpush1.msra.mxu0 %v1535
    %1538 = vmatprep.subr.mxu0 0.0
    %1539 = vmatpush1.msra.mxu0 0.0
    %1540 = vmatprep.subr.mxu0 0.0
    %1541 = vmatpush1.msra.mxu0 0.0
    %1542 = vmatprep.subr.mxu0 0.0
    %1543 = vmatpush1.msra.mxu0 0.0
    %1544 = vmatprep.subr.mxu0 0.0
    %1545 = vmatpush1.msra.mxu0 0.0
    %1546 = vmatprep.subr.mxu0 0.0
    %1547 = vmatpush1.msra.mxu0 0.0
    %1548 = vmatprep.subr.mxu0 0.0
    %1549 = vmatpush1.msra.mxu0 0.0
    %1550 = vmatprep.subr.mxu0 0.0
    %1551 = vmatpush1.msra.mxu0 0.0
    %1552 = vmatprep.subr.mxu0 0.0
    %1553 = vmatpush1.msra.mxu0 0.0
    %1554 = vmatprep.subr.mxu0 0.0
    %1555 = vmatpush1.msra.mxu0 0.0
    %1556 = vmatprep.subr.mxu0 0.0
    %1557 = vmatpush1.msra.mxu0 0.0
    %1558 = vmatprep.subr.mxu0 0.0
    %1559 = vmatpush1.msra.mxu0 0.0
    %1560 = vmatprep.subr.mxu0 0.0
    %1561 = vmatpush1.msra.mxu0 0.0
    %1562 = vmatprep.subr.mxu0 0.0
    %1563 = vmatpush1.msra.mxu0 0.0
    %1564 = vmatprep.subr.mxu0 0.0
    %1565 = vmatpush1.msra.mxu0 0.0
    %1566 = vmatprep.subr.mxu0 0.0
    %1567 = vmatpush1.msra.mxu0 0.0
    %1568 = vmatprep.subr.mxu0 0.0
    %1569 = vmatpush1.msra.mxu0 0.0
    %1570 = vmatprep.subr.mxu0 0.0
    %1571 = vmatpush1.msra.mxu0 0.0
    %1572 = vmatprep.subr.mxu0 0.0
    %1573 = vmatpush1.msra.mxu0 0.0
    %1574 = vmatprep.subr.mxu0 0.0
    %1575 = vmatpush1.msra.mxu0 0.0
    %1576 = vmatprep.subr.mxu0 0.0
    %1577 = vmatpush1.msra.mxu0 0.0
    %1578 = vmatprep.subr.mxu0 0.0
    %1579 = vmatpush1.msra.mxu0 0.0
    %1580 = vmatprep.subr.mxu0 0.0
    %1581 = vmatpush1.msra.mxu0 0.0
    %1582 = vmatprep.subr.mxu0 0.0
    %1583 = vmatpush1.msra.mxu0 0.0
    %1584 = vmatprep.subr.mxu0 0.0
    %1585 = vmatpush1.msra.mxu0 0.0
    %1586 = vmatprep.subr.mxu0 0.0
    %1587 = vmatpush1.msra.mxu0 0.0
    %1588 = vmatprep.subr.mxu0 0.0
    %1589 = vmatpush1.msra.mxu0 0.0
    %1590 = vmatprep.subr.mxu0 0.0
    %1591 = vmatpush1.msra.mxu0 0.0
    %1592 = vmatprep.subr.mxu0 0.0
    %1593 = vmatpush1.msra.mxu0 0.0
    %1594 = vmatprep.subr.mxu0 0.0
    %1595 = vmatpush1.msra.mxu0 0.0
    %1596 = vmatprep.subr.mxu0 0.0
    %1597 = vmatpush1.msra.mxu0 0.0
    %1598 = vmatprep.subr.mxu0 0.0
    %1599 = vmatpush1.msra.mxu0 0.0
    %1600 = vmatprep.mubr.f32.mxu0 0.0
    %1601 = vmatmul.mubr.f32.gmra.mrb[0].mxu0 %v192
    %v1602 = vpop.f32.mrb[0].mxu0
    %v1603 = vadd.f32 %v56, %v1602
    %v1604 = vpop.f32.mrb[0].mxu0
    %1605 = vmatprep.mubr.f32.mxu0 0.0
    %1606 = vmatmul.mubr.f32.gmra.mrb[0].mxu0 %v195
    %v1607 = vpop.f32.mrb[0].mxu0
    %v1608 = vadd.f32 %v57, %v1607
    %v1609 = vpop.f32.mrb[0].mxu0
    %1610 = vmatprep.mubr.f32.mxu0 0.0
    %1611 = vmatmul.mubr.f32.gmra.mrb[0].mxu0 %v198
    %v1612 = vpop.f32.mrb[0].mxu0
    %v1613 = vadd.f32 %v58, %v1612
    %v1614 = vpop.f32.mrb[0].mxu0
    %1615 = vmatprep.mubr.f32.mxu0 0.0
    %1616 = vmatmul.mubr.f32.gmra.mrb[0].mxu0 %v201
    %v1617 = vpop.f32.mrb[0].mxu0
    %v1618 = vadd.f32 %v59, %v1617
    %v1619 = vpop.f32.mrb[0].mxu0
    %1620 = vmatprep.mubr.f32.mxu0 0.0
    %1621 = vmatmul.mubr.f32.gmra.mrb[0].mxu0 %v204
    %v1622 = vpop.f32.mrb[0].mxu0
    %v1623 = vadd.f32 %v60, %v1622
    %v1624 = vpop.f32.mrb[0].mxu0
    %1625 = vmatprep.mubr.f32.mxu0 0.0
    %1626 = vmatmul.mubr.f32.gmra.mrb[0].mxu0 %v207
    %v1627 = vpop.f32.mrb[0].mxu0
    %v1628 = vadd.f32 %v61, %v1627
    %v1629 = vpop.f32.mrb[0].mxu0
    %1630 = vmatprep.mubr.f32.mxu0 0.0
    %1631 = vmatmul.mubr.f32.gmra.mrb[0].mxu0 %v210
    %v1632 = vpop.f32.mrb[0].mxu0
    %v1633 = vadd.f32 %v62, %v1632
    %v1634 = vpop.f32.mrb[0].mxu0
    %1635 = vmatprep.mubr.f32.mxu0 0.0
    %1636 = vmatmul.mubr.f32.gmra.mrb[0].mxu0 %v213
    %v1637 = vpop.f32.mrb[0].mxu0
    %v1638 = vadd.f32 %v63, %v1637
    %v1639 = vpop.f32.mrb[0].mxu0
    %1640 = vdwg.mxu0
    %1641 = vrot.lane.b32.xlu0 %v1417, 1
    %v1642 = vpop.permute.xlu0 %1641
    %1643 = vrot.lane.b32.xlu0 %v1419, 1
    %v1644 = vpop.permute.xlu0 %1643
    %1645 = vrot.lane.b32.xlu0 %v1421, 1
    %v1646 = vpop.permute.xlu0 %1645
    %1647 = vrot.lane.b32.xlu0 %v1423, 1
    %v1648 = vpop.permute.xlu0 %1647
    %1649 = vrot.lane.b32.xlu0 %v1425, 1
    %v1650 = vpop.permute.xlu0 %1649
    %1651 = vrot.lane.b32.xlu0 %v1427, 1
    %v1652 = vpop.permute.xlu0 %1651
    %1653 = vrot.lane.b32.xlu0 %v1429, 1
    %v1654 = vpop.permute.xlu0 %1653
    %1655 = vrot.lane.b32.xlu0 %v1431, 1
    %v1656 = vpop.permute.xlu0 %1655
    %1657 = vrot.lane.b32.xlu0 %v1418, 1
    %v1658 = vpop.permute.xlu0 %1657
    %1659 = vrot.lane.b32.xlu0 %v1420, 1
    %v1660 = vpop.permute.xlu0 %1659
    %1661 = vrot.lane.b32.xlu0 %v1422, 1
    %v1662 = vpop.permute.xlu0 %1661
    %1663 = vrot.lane.b32.xlu0 %v1424, 1
    %v1664 = vpop.permute.xlu0 %1663
    %1665 = vrot.lane.b32.xlu0 %v1426, 1
    %v1666 = vpop.permute.xlu0 %1665
    %1667 = vrot.lane.b32.xlu0 %v1428, 1
    %v1668 = vpop.permute.xlu0 %1667
    %1669 = vrot.lane.b32.xlu0 %v1430, 1
    %v1670 = vpop.permute.xlu0 %1669
    %1671 = vrot.lane.b32.xlu0 %v1432, 1
    %v1672 = vpop.permute.xlu0 %1671
    %v1673 = vsel %vm354, %v1642, %v1658
    %v1674 = vsel %vm354, %v1644, %v1660
    %v1675 = vsel %vm354, %v1646, %v1662
    %v1676 = vsel %vm354, %v1648, %v1664
    %v1677 = vsel %vm354, %v1650, %v1666
    %v1678 = vsel %vm354, %v1652, %v1668
    %v1679 = vsel %vm354, %v1654, %v1670
    %v1680 = vsel %vm354, %v1656, %v1672
    %v1681 = vsel %vm354, %v1658, %v1642
    %v1682 = vsel %vm354, %v1660, %v1644
    %v1683 = vsel %vm354, %v1662, %v1646
    %v1684 = vsel %vm354, %v1664, %v1648
    %v1685 = vsel %vm354, %v1666, %v1650
    %v1686 = vsel %vm354, %v1668, %v1652
    %v1687 = vsel %vm354, %v1670, %v1654
    %v1688 = vsel %vm354, %v1672, %v1656
    %v1689 = vsel %vm373, %v1681, 0.0
    %v1690 = vsel %vm374, %v1673, 0.0
    %v1691 = vsel %vm373, %v1682, 0.0
    %v1692 = vsel %vm374, %v1674, 0.0
    %v1693 = vsel %vm373, %v1683, 0.0
    %v1694 = vsel %vm374, %v1675, 0.0
    %v1695 = vsel %vm373, %v1684, 0.0
    %v1696 = vsel %vm374, %v1676, 0.0
    %v1697 = vsel %vm373, %v1685, 0.0
    %v1698 = vsel %vm374, %v1677, 0.0
    %v1699 = vsel %vm373, %v1686, 0.0
    %v1700 = vsel %vm374, %v1678, 0.0
    %v1701 = vsel %vm373, %v1687, 0.0
    %v1702 = vsel %vm374, %v1679, 0.0
    %v1703 = vsel %vm373, %v1688, 0.0
    %v1704 = vsel %vm374, %v1680, 0.0
    %1705 = vrot.lane.b32.xlu0 %v1417, 127
    %v1706 = vpop.permute.xlu0 %1705
    %1707 = vrot.lane.b32.xlu0 %v1419, 127
    %v1708 = vpop.permute.xlu0 %1707
    %1709 = vrot.lane.b32.xlu0 %v1421, 127
    %v1710 = vpop.permute.xlu0 %1709
    %1711 = vrot.lane.b32.xlu0 %v1423, 127
    %v1712 = vpop.permute.xlu0 %1711
    %1713 = vrot.lane.b32.xlu0 %v1425, 127
    %v1714 = vpop.permute.xlu0 %1713
    %1715 = vrot.lane.b32.xlu0 %v1427, 127
    %v1716 = vpop.permute.xlu0 %1715
    %1717 = vrot.lane.b32.xlu0 %v1429, 127
    %v1718 = vpop.permute.xlu0 %1717
    %1719 = vrot.lane.b32.xlu0 %v1431, 127
    %v1720 = vpop.permute.xlu0 %1719
    %1721 = vrot.lane.b32.xlu0 %v1418, 127
    %v1722 = vpop.permute.xlu0 %1721
    %1723 = vrot.lane.b32.xlu0 %v1420, 127
    %v1724 = vpop.permute.xlu0 %1723
    %1725 = vrot.lane.b32.xlu0 %v1422, 127
    %v1726 = vpop.permute.xlu0 %1725
    %1727 = vrot.lane.b32.xlu0 %v1424, 127
    %v1728 = vpop.permute.xlu0 %1727
    %1729 = vrot.lane.b32.xlu0 %v1426, 127
    %v1730 = vpop.permute.xlu0 %1729
    %1731 = vrot.lane.b32.xlu0 %v1428, 127
    %v1732 = vpop.permute.xlu0 %1731
    %1733 = vrot.lane.b32.xlu0 %v1430, 127
    %v1734 = vpop.permute.xlu0 %1733
    %1735 = vrot.lane.b32.xlu0 %v1432, 127
    %v1736 = vpop.permute.xlu0 %1735
    %v1737 = vsel %vm425, %v1706, %v1722
    %v1738 = vsel %vm425, %v1708, %v1724
    %v1739 = vsel %vm425, %v1710, %v1726
    %v1740 = vsel %vm425, %v1712, %v1728
    %v1741 = vsel %vm425, %v1714, %v1730
    %v1742 = vsel %vm425, %v1716, %v1732
    %v1743 = vsel %vm425, %v1718, %v1734
    %v1744 = vsel %vm425, %v1720, %v1736
    %v1745 = vsel %vm425, %v1722, %v1706
    %v1746 = vsel %vm425, %v1724, %v1708
    %v1747 = vsel %vm425, %v1726, %v1710
    %v1748 = vsel %vm425, %v1728, %v1712
    %v1749 = vsel %vm425, %v1730, %v1714
    %v1750 = vsel %vm425, %v1732, %v1716
    %v1751 = vsel %vm425, %v1734, %v1718
    %v1752 = vsel %vm425, %v1736, %v1720
    %v1753 = vsel %vm444, %v1737, 0.0
    %v1754 = vsel %vm445, %v1745, 0.0
    %v1755 = vsel %vm444, %v1738, 0.0
    %v1756 = vsel %vm445, %v1746, 0.0
    %v1757 = vsel %vm444, %v1739, 0.0
    %v1758 = vsel %vm445, %v1747, 0.0
    %v1759 = vsel %vm444, %v1740, 0.0
    %v1760 = vsel %vm445, %v1748, 0.0
    %v1761 = vsel %vm444, %v1741, 0.0
    %v1762 = vsel %vm445, %v1749, 0.0
    %v1763 = vsel %vm444, %v1742, 0.0
    %v1764 = vsel %vm445, %v1750, 0.0
    %v1765 = vsel %vm444, %v1743, 0.0
    %v1766 = vsel %vm445, %v1751, 0.0
    %v1767 = vsel %vm444, %v1744, 0.0
    %v1768 = vsel %vm445, %v1752, 0.0
    %v1769 = vmul.f32 %v465, %v1689
    %v1770 = vmul.f32 %v465, %v1690
    %v1771 = vmul.f32 %v470, %v1691
    %v1772 = vmul.f32 %v470, %v1692
    %v1773 = vmul.f32 %v475, %v1693
    %v1774 = vmul.f32 %v475, %v1694
    %v1775 = vmul.f32 %v480, %v1695
    %v1776 = vmul.f32 %v480, %v1696
    %v1777 = vmul.f32 %v485, %v1697
    %v1778 = vmul.f32 %v485, %v1698
    %v1779 = vmul.f32 %v490, %v1699
    %v1780 = vmul.f32 %v490, %v1700
    %v1781 = vmul.f32 %v495, %v1701
    %v1782 = vmul.f32 %v495, %v1702
    %v1783 = vmul.f32 %v500, %v1703
    %v1784 = vmul.f32 %v500, %v1704
    %v1785 = vmul.f32 %v520, %v1417
    %v1786 = vmul.f32 %v520, %v1418
    %v1787 = vmul.f32 %v524, %v1419
    %v1788 = vmul.f32 %v524, %v1420
    %v1789 = vmul.f32 %v528, %v1421
    %v1790 = vmul.f32 %v528, %v1422
    %v1791 = vmul.f32 %v532, %v1423
    %v1792 = vmul.f32 %v532, %v1424
    %v1793 = vmul.f32 %v536, %v1425
    %v1794 = vmul.f32 %v536, %v1426
    %v1795 = vmul.f32 %v540, %v1427
    %v1796 = vmul.f32 %v540, %v1428
    %v1797 = vmul.f32 %v544, %v1429
    %v1798 = vmul.f32 %v544, %v1430
    %v1799 = vmul.f32 %v548, %v1431
    %v1800 = vmul.f32 %v548, %v1432
    %v1801 = vadd.f32 %v1769, %v1785
    %v1802 = vadd.f32 %v1770, %v1786
    %v1803 = vadd.f32 %v1771, %v1787
    %v1804 = vadd.f32 %v1772, %v1788
    %v1805 = vadd.f32 %v1773, %v1789
    %v1806 = vadd.f32 %v1774, %v1790
    %v1807 = vadd.f32 %v1775, %v1791
    %v1808 = vadd.f32 %v1776, %v1792
    %v1809 = vadd.f32 %v1777, %v1793
    %v1810 = vadd.f32 %v1778, %v1794
    %v1811 = vadd.f32 %v1779, %v1795
    %v1812 = vadd.f32 %v1780, %v1796
    %v1813 = vadd.f32 %v1781, %v1797
    %v1814 = vadd.f32 %v1782, %v1798
    %v1815 = vadd.f32 %v1783, %v1799
    %v1816 = vadd.f32 %v1784, %v1800
    %v1817 = vmul.f32 %v584, %v1753
    %v1818 = vmul.f32 %v584, %v1754
    %v1819 = vmul.f32 %v588, %v1755
    %v1820 = vmul.f32 %v588, %v1756
    %v1821 = vmul.f32 %v592, %v1757
    %v1822 = vmul.f32 %v592, %v1758
    %v1823 = vmul.f32 %v596, %v1759
    %v1824 = vmul.f32 %v596, %v1760
    %v1825 = vmul.f32 %v600, %v1761
    %v1826 = vmul.f32 %v600, %v1762
    %v1827 = vmul.f32 %v604, %v1763
    %v1828 = vmul.f32 %v604, %v1764
    %v1829 = vmul.f32 %v608, %v1765
    %v1830 = vmul.f32 %v608, %v1766
    %v1831 = vmul.f32 %v612, %v1767
    %v1832 = vmul.f32 %v612, %v1768
    %v1833 = vadd.f32 %v1801, %v1817
    %v1834 = vadd.f32 %v1802, %v1818
    %v1835 = vadd.f32 %v1803, %v1819
    %v1836 = vadd.f32 %v1804, %v1820
    %v1837 = vadd.f32 %v1805, %v1821
    %v1838 = vadd.f32 %v1806, %v1822
    %v1839 = vadd.f32 %v1807, %v1823
    %v1840 = vadd.f32 %v1808, %v1824
    %v1841 = vadd.f32 %v1809, %v1825
    %v1842 = vadd.f32 %v1810, %v1826
    %v1843 = vadd.f32 %v1811, %v1827
    %v1844 = vadd.f32 %v1812, %v1828
    %v1845 = vadd.f32 %v1813, %v1829
    %v1846 = vadd.f32 %v1814, %v1830
    %v1847 = vadd.f32 %v1815, %v1831
    %v1848 = vadd.f32 %v1816, %v1832
    %1850 = vset.pattern.permute.xlu0 0
    %1851 = vperm.xlu0 %1850, %v1603
    %v1852 = vpop.permute.xlu0 %1851
    %1855 = vset.pattern.permute.xlu0 0
    %1856 = vperm.xlu0 %1855, %v1608
    %v1857 = vpop.permute.xlu0 %1856
    %1860 = vset.pattern.permute.xlu0 0
    %1861 = vperm.xlu0 %1860, %v1613
    %v1862 = vpop.permute.xlu0 %1861
    %1865 = vset.pattern.permute.xlu0 0
    %1866 = vperm.xlu0 %1865, %v1618
    %v1867 = vpop.permute.xlu0 %1866
    %1870 = vset.pattern.permute.xlu0 0
    %1871 = vperm.xlu0 %1870, %v1623
    %v1872 = vpop.permute.xlu0 %1871
    %1875 = vset.pattern.permute.xlu0 0
    %1876 = vperm.xlu0 %1875, %v1628
    %v1877 = vpop.permute.xlu0 %1876
    %1880 = vset.pattern.permute.xlu0 0
    %1881 = vperm.xlu0 %1880, %v1633
    %v1882 = vpop.permute.xlu0 %1881
    %1885 = vset.pattern.permute.xlu0 0
    %1886 = vperm.xlu0 %1885, %v1638
    %v1887 = vpop.permute.xlu0 %1886
    %v1889 = vadd.f32 %v1833, %v1852
    %v1890 = vadd.f32 %v1834, %v1852
    %v1891 = vadd.f32 %v1835, %v1857
    %v1892 = vadd.f32 %v1836, %v1857
    %v1893 = vadd.f32 %v1837, %v1862
    %v1894 = vadd.f32 %v1838, %v1862
    %v1895 = vadd.f32 %v1839, %v1867
    %v1896 = vadd.f32 %v1840, %v1867
    %v1897 = vadd.f32 %v1841, %v1872
    %v1898 = vadd.f32 %v1842, %v1872
    %v1899 = vadd.f32 %v1843, %v1877
    %v1900 = vadd.f32 %v1844, %v1877
    %v1901 = vadd.f32 %v1845, %v1882
    %v1902 = vadd.f32 %v1846, %v1882
    %v1903 = vadd.f32 %v1847, %v1887
    %v1904 = vadd.f32 %v1848, %v1887
    %v1905 = vsub.f32 0.0, %v1889
    %v1906 = vsub.f32 0.0, %v1890
    %v1907 = vsub.f32 0.0, %v1891
    %v1908 = vsub.f32 0.0, %v1892
    %v1909 = vsub.f32 0.0, %v1893
    %v1910 = vsub.f32 0.0, %v1894
    %v1911 = vsub.f32 0.0, %v1895
    %v1912 = vsub.f32 0.0, %v1896
    %v1913 = vsub.f32 0.0, %v1897
    %v1914 = vsub.f32 0.0, %v1898
    %v1915 = vsub.f32 0.0, %v1899
    %v1916 = vsub.f32 0.0, %v1900
    %v1917 = vsub.f32 0.0, %v1901
    %v1918 = vsub.f32 0.0, %v1902
    %v1919 = vsub.f32 0.0, %v1903
    %v1920 = vsub.f32 0.0, %v1904
    %v1921 = vmul.f32 %v1905, 1.442695
    %v1922 = vpow.pop %v1921
    %v1923 = vmul.f32 %v1906, 1.442695
    %v1924 = vpow.pop %v1923
    %v1925 = vmul.f32 %v1907, 1.442695
    %v1926 = vpow.pop %v1925
    %v1927 = vmul.f32 %v1908, 1.442695
    %v1928 = vpow.pop %v1927
    %v1929 = vmul.f32 %v1909, 1.442695
    %v1930 = vpow.pop %v1929
    %v1931 = vmul.f32 %v1910, 1.442695
    %v1932 = vpow.pop %v1931
    %v1933 = vmul.f32 %v1911, 1.442695
    %v1934 = vpow.pop %v1933
    %v1935 = vmul.f32 %v1912, 1.442695
    %v1936 = vpow.pop %v1935
    %v1937 = vmul.f32 %v1913, 1.442695
    %v1938 = vpow.pop %v1937
    %v1939 = vmul.f32 %v1914, 1.442695
    %v1940 = vpow.pop %v1939
    %v1941 = vmul.f32 %v1915, 1.442695
    %v1942 = vpow.pop %v1941
    %v1943 = vmul.f32 %v1916, 1.442695
    %v1944 = vpow.pop %v1943
    %v1945 = vmul.f32 %v1917, 1.442695
    %v1946 = vpow.pop %v1945
    %v1947 = vmul.f32 %v1918, 1.442695
    %v1948 = vpow.pop %v1947
    %v1949 = vmul.f32 %v1919, 1.442695
    %v1950 = vpow.pop %v1949
    %v1951 = vmul.f32 %v1920, 1.442695
    %v1952 = vpow.pop %v1951
    %v1953 = vadd.f32 %v1922, 1.0
    %v1954 = vadd.f32 %v1924, 1.0
    %v1955 = vadd.f32 %v1926, 1.0
    %v1956 = vadd.f32 %v1928, 1.0
    %v1957 = vadd.f32 %v1930, 1.0
    %v1958 = vadd.f32 %v1932, 1.0
    %v1959 = vadd.f32 %v1934, 1.0
    %v1960 = vadd.f32 %v1936, 1.0
    %v1961 = vadd.f32 %v1938, 1.0
    %v1962 = vadd.f32 %v1940, 1.0
    %v1963 = vadd.f32 %v1942, 1.0
    %v1964 = vadd.f32 %v1944, 1.0
    %v1965 = vadd.f32 %v1946, 1.0
    %v1966 = vadd.f32 %v1948, 1.0
    %v1967 = vadd.f32 %v1950, 1.0
    %v1968 = vadd.f32 %v1952, 1.0
    %v1969 = vrcp.pop %v1953
    %v1970 = vrcp.pop %v1954
    %v1971 = vrcp.pop %v1955
    %v1972 = vrcp.pop %v1956
    %v1973 = vrcp.pop %v1957
    %v1974 = vrcp.pop %v1958
    %v1975 = vrcp.pop %v1959
    %v1976 = vrcp.pop %v1960
    %v1977 = vrcp.pop %v1961
    %v1978 = vrcp.pop %v1962
    %v1979 = vrcp.pop %v1963
    %v1980 = vrcp.pop %v1964
    %v1981 = vrcp.pop %v1965
    %v1982 = vrcp.pop %v1966
    %v1983 = vrcp.pop %v1967
    %v1984 = vrcp.pop %v1968
    %v1985 = vmul.f32 %v1417, %v1969
    %v1986 = vmul.f32 %v1418, %v1970
    %v1987 = vmul.f32 %v1419, %v1971
    %v1988 = vmul.f32 %v1420, %v1972
    %v1989 = vmul.f32 %v1421, %v1973
    %v1990 = vmul.f32 %v1422, %v1974
    %v1991 = vmul.f32 %v1423, %v1975
    %v1992 = vmul.f32 %v1424, %v1976
    %v1993 = vmul.f32 %v1425, %v1977
    %v1994 = vmul.f32 %v1426, %v1978
    %v1995 = vmul.f32 %v1427, %v1979
    %v1996 = vmul.f32 %v1428, %v1980
    %v1997 = vmul.f32 %v1429, %v1981
    %v1998 = vmul.f32 %v1430, %v1982
    %v1999 = vmul.f32 %v1431, %v1983
    %v2000 = vmul.f32 %v1432, %v1984
    %s2001 = scalar_lea.vmem [#allocation5], 256
    %2002 = vst [vmem:[%s2001] sm:$0xff] %v1985
    %2003 = vst [vmem:[%s2001 + $0x8] sm:$0xff] %v1986
    %2004 = vst [vmem:[%s2001 + $0x10] sm:$0xff] %v1987
    %2005 = vst [vmem:[%s2001 + $0x18] sm:$0xff] %v1988
    %2006 = vst [vmem:[%s2001 + $0x20] sm:$0xff] %v1989
    %2007 = vst [vmem:[%s2001 + $0x28] sm:$0xff] %v1990
    %2008 = vst [vmem:[%s2001 + $0x30] sm:$0xff] %v1991
    %2009 = vst [vmem:[%s2001 + $0x38] sm:$0xff] %v1992
    %2010 = vst [vmem:[%s2001 + $0x40] sm:$0xff] %v1993
    %2011 = vst [vmem:[%s2001 + $0x48] sm:$0xff] %v1994
    %2012 = vst [vmem:[%s2001 + $0x50] sm:$0xff] %v1995
    %2013 = vst [vmem:[%s2001 + $0x58] sm:$0xff] %v1996
    %2014 = vst [vmem:[%s2001 + $0x60] sm:$0xff] %v1997
    %2015 = vst [vmem:[%s2001 + $0x68] sm:$0xff] %v1998
    %2016 = vst [vmem:[%s2001 + $0x70] sm:$0xff] %v1999
    %2017 = vst [vmem:[%s2001 + $0x78] sm:$0xff] %v2000
    %s2018 = scalar_lea.vmem [#allocation2], 384
    %v2019 = vld [vmem:[%s2018] sm:$0xff]
    %v2020 = vld [vmem:[%s2018 + $0x8] sm:$0xff]
    %v2021 = vld [vmem:[%s2018 + $0x10] sm:$0xff]
    %v2022 = vld [vmem:[%s2018 + $0x18] sm:$0xff]
    %v2023 = vld [vmem:[%s2018 + $0x20] sm:$0xff]
    %v2024 = vld [vmem:[%s2018 + $0x28] sm:$0xff]
    %v2025 = vld [vmem:[%s2018 + $0x30] sm:$0xff]
    %v2026 = vld [vmem:[%s2018 + $0x38] sm:$0xff]
    %v2027 = vld [vmem:[%s2018 + $0x40] sm:$0xff]
    %v2028 = vld [vmem:[%s2018 + $0x48] sm:$0xff]
    %v2029 = vld [vmem:[%s2018 + $0x50] sm:$0xff]
    %v2030 = vld [vmem:[%s2018 + $0x58] sm:$0xff]
    %v2031 = vld [vmem:[%s2018 + $0x60] sm:$0xff]
    %v2032 = vld [vmem:[%s2018 + $0x68] sm:$0xff]
    %v2033 = vld [vmem:[%s2018 + $0x70] sm:$0xff]
    %v2034 = vld [vmem:[%s2018 + $0x78] sm:$0xff]
    %v2035 = vadd.f32 %v2019, %v2020
    %2036 = vadd.xlane.f32.xlu0 %v2035
    %v2037 = vpop.xlane.xlu0 %2036
    %v2038 = vadd.f32 %v2021, %v2022
    %2039 = vadd.xlane.f32.xlu0 %v2038
    %v2040 = vpop.xlane.xlu0 %2039
    %v2041 = vadd.f32 %v2023, %v2024
    %2042 = vadd.xlane.f32.xlu0 %v2041
    %v2043 = vpop.xlane.xlu0 %2042
    %v2044 = vadd.f32 %v2025, %v2026
    %2045 = vadd.xlane.f32.xlu0 %v2044
    %v2046 = vpop.xlane.xlu0 %2045
    %v2047 = vadd.f32 %v2027, %v2028
    %2048 = vadd.xlane.f32.xlu0 %v2047
    %v2049 = vpop.xlane.xlu0 %2048
    %v2050 = vadd.f32 %v2029, %v2030
    %2051 = vadd.xlane.f32.xlu0 %v2050
    %v2052 = vpop.xlane.xlu0 %2051
    %v2053 = vadd.f32 %v2031, %v2032
    %2054 = vadd.xlane.f32.xlu0 %v2053
    %v2055 = vpop.xlane.xlu0 %2054
    %v2056 = vadd.f32 %v2033, %v2034
    %2057 = vadd.xlane.f32.xlu0 %v2056
    %v2058 = vpop.xlane.xlu0 %2057
    %v2059 = vmul.f32 %v2037, 0.00390625
    %v2060 = vmul.f32 %v2040, 0.00390625
    %v2061 = vmul.f32 %v2043, 0.00390625
    %v2062 = vmul.f32 %v2046, 0.00390625
    %v2063 = vmul.f32 %v2049, 0.00390625
    %v2064 = vmul.f32 %v2052, 0.00390625
    %v2065 = vmul.f32 %v2055, 0.00390625
    %v2066 = vmul.f32 %v2058, 0.00390625
    %2067 = vmatprep.subr.mxu0 0.0
    %2068 = vmatpush1.msra.mxu0 %v2059
    %2069 = vmatprep.subr.mxu0 0.0
    %2070 = vmatpush1.msra.mxu0 %v2060
    %2071 = vmatprep.subr.mxu0 0.0
    %2072 = vmatpush1.msra.mxu0 %v2061
    %2073 = vmatprep.subr.mxu0 0.0
    %2074 = vmatpush1.msra.mxu0 %v2062
    %2075 = vmatprep.subr.mxu0 0.0
    %2076 = vmatpush1.msra.mxu0 %v2063
    %2077 = vmatprep.subr.mxu0 0.0
    %2078 = vmatpush1.msra.mxu0 %v2064
    %2079 = vmatprep.subr.mxu0 0.0
    %2080 = vmatpush1.msra.mxu0 %v2065
    %2081 = vmatprep.subr.mxu0 0.0
    %2082 = vmatpush1.msra.mxu0 %v2066
    %2083 = vmatprep.subr.mxu0 0.0
    %2084 = vmatpush1.msra.mxu0 0.0
    %2085 = vmatprep.subr.mxu0 0.0
    %2086 = vmatpush1.msra.mxu0 0.0
    %2087 = vmatprep.subr.mxu0 0.0
    %2088 = vmatpush1.msra.mxu0 0.0
    %2089 = vmatprep.subr.mxu0 0.0
    %2090 = vmatpush1.msra.mxu0 0.0
    %2091 = vmatprep.subr.mxu0 0.0
    %2092 = vmatpush1.msra.mxu0 0.0
    %2093 = vmatprep.subr.mxu0 0.0
    %2094 = vmatpush1.msra.mxu0 0.0
    %2095 = vmatprep.subr.mxu0 0.0
    %2096 = vmatpush1.msra.mxu0 0.0
    %2097 = vmatprep.subr.mxu0 0.0
    %2098 = vmatpush1.msra.mxu0 0.0
    %2099 = vmatprep.subr.mxu0 0.0
    %2100 = vmatpush1.msra.mxu0 0.0
    %2101 = vmatprep.subr.mxu0 0.0
    %2102 = vmatpush1.msra.mxu0 0.0
    %2103 = vmatprep.subr.mxu0 0.0
    %2104 = vmatpush1.msra.mxu0 0.0
    %2105 = vmatprep.subr.mxu0 0.0
    %2106 = vmatpush1.msra.mxu0 0.0
    %2107 = vmatprep.subr.mxu0 0.0
    %2108 = vmatpush1.msra.mxu0 0.0
    %2109 = vmatprep.subr.mxu0 0.0
    %2110 = vmatpush1.msra.mxu0 0.0
    %2111 = vmatprep.subr.mxu0 0.0
    %2112 = vmatpush1.msra.mxu0 0.0
    %2113 = vmatprep.subr.mxu0 0.0
    %2114 = vmatpush1.msra.mxu0 0.0
    %2115 = vmatprep.subr.mxu0 0.0
    %2116 = vmatpush1.msra.mxu0 0.0
    %2117 = vmatprep.subr.mxu0 0.0
    %2118 = vmatpush1.msra.mxu0 0.0
    %2119 = vmatprep.subr.mxu0 0.0
    %2120 = vmatpush1.msra.mxu0 0.0
    %2121 = vmatprep.subr.mxu0 0.0
    %2122 = vmatpush1.msra.mxu0 0.0
    %2123 = vmatprep.subr.mxu0 0.0
    %2124 = vmatpush1.msra.mxu0 0.0
    %2125 = vmatprep.subr.mxu0 0.0
    %2126 = vmatpush1.msra.mxu0 0.0
    %2127 = vmatprep.subr.mxu0 0.0
    %2128 = vmatpush1.msra.mxu0 0.0
    %2129 = vmatprep.subr.mxu0 0.0
    %2130 = vmatpush1.msra.mxu0 0.0
    %2131 = vmatprep.mubr.f32.mxu0 0.0
    %2132 = vmatmul.mubr.f32.gmra.mrb[0].mxu0 %v117
    %v2133 = vpop.f32.mrb[0].mxu0
    %v2134 = vadd.f32 %v47, %v2133
    %v2135 = vpop.f32.mrb[0].mxu0
    %2136 = vdwg.mxu0
    %v2137 = vmax.f32 %v2134, 0.0
    %2138 = vmatprep.subr.mxu0 0.0
    %2139 = vmatpush1.msra.mxu0 %v2137
    %2140 = vmatprep.subr.mxu0 0.0
    %2141 = vmatpush1.msra.mxu0 0.0
    %2142 = vmatprep.subr.mxu0 0.0
    %2143 = vmatpush1.msra.mxu0 0.0
    %2144 = vmatprep.subr.mxu0 0.0
    %2145 = vmatpush1.msra.mxu0 0.0
    %2146 = vmatprep.subr.mxu0 0.0
    %2147 = vmatpush1.msra.mxu0 0.0
    %2148 = vmatprep.subr.mxu0 0.0
    %2149 = vmatpush1.msra.mxu0 0.0
    %2150 = vmatprep.subr.mxu0 0.0
    %2151 = vmatpush1.msra.mxu0 0.0
    %2152 = vmatprep.subr.mxu0 0.0
    %2153 = vmatpush1.msra.mxu0 0.0
    %2154 = vmatprep.subr.mxu0 0.0
    %2155 = vmatpush1.msra.mxu0 0.0
    %2156 = vmatprep.subr.mxu0 0.0
    %2157 = vmatpush1.msra.mxu0 0.0
    %2158 = vmatprep.subr.mxu0 0.0
    %2159 = vmatpush1.msra.mxu0 0.0
    %2160 = vmatprep.subr.mxu0 0.0
    %2161 = vmatpush1.msra.mxu0 0.0
    %2162 = vmatprep.subr.mxu0 0.0
    %2163 = vmatpush1.msra.mxu0 0.0
    %2164 = vmatprep.subr.mxu0 0.0
    %2165 = vmatpush1.msra.mxu0 0.0
    %2166 = vmatprep.subr.mxu0 0.0
    %2167 = vmatpush1.msra.mxu0 0.0
    %2168 = vmatprep.subr.mxu0 0.0
    %2169 = vmatpush1.msra.mxu0 0.0
    %2170 = vmatprep.subr.mxu0 0.0
    %2171 = vmatpush1.msra.mxu0 0.0
    %2172 = vmatprep.subr.mxu0 0.0
    %2173 = vmatpush1.msra.mxu0 0.0
    %2174 = vmatprep.subr.mxu0 0.0
    %2175 = vmatpush1.msra.mxu0 0.0
    %2176 = vmatprep.subr.mxu0 0.0
    %2177 = vmatpush1.msra.mxu0 0.0
    %2178 = vmatprep.subr.mxu0 0.0
    %2179 = vmatpush1.msra.mxu0 0.0
    %2180 = vmatprep.subr.mxu0 0.0
    %2181 = vmatpush1.msra.mxu0 0.0
    %2182 = vmatprep.subr.mxu0 0.0
    %2183 = vmatpush1.msra.mxu0 0.0
    %2184 = vmatprep.subr.mxu0 0.0
    %2185 = vmatpush1.msra.mxu0 0.0
    %2186 = vmatprep.subr.mxu0 0.0
    %2187 = vmatpush1.msra.mxu0 0.0
    %2188 = vmatprep.subr.mxu0 0.0
    %2189 = vmatpush1.msra.mxu0 0.0
    %2190 = vmatprep.subr.mxu0 0.0
    %2191 = vmatpush1.msra.mxu0 0.0
    %2192 = vmatprep.subr.mxu0 0.0
    %2193 = vmatpush1.msra.mxu0 0.0
    %2194 = vmatprep.subr.mxu0 0.0
    %2195 = vmatpush1.msra.mxu0 0.0
    %2196 = vmatprep.subr.mxu0 0.0
    %2197 = vmatpush1.msra.mxu0 0.0
    %2198 = vmatprep.subr.mxu0 0.0
    %2199 = vmatpush1.msra.mxu0 0.0
    %2200 = vmatprep.subr.mxu0 0.0
    %2201 = vmatpush1.msra.mxu0 0.0
    %2202 = vmatprep.mubr.f32.mxu0 0.0
    %2203 = vmatmul.mubr.f32.gmra.mrb[0].mxu0 %v192
    %v2204 = vpop.f32.mrb[0].mxu0
    %v2205 = vadd.f32 %v56, %v2204
    %v2206 = vpop.f32.mrb[0].mxu0
    %2207 = vmatprep.mubr.f32.mxu0 0.0
    %2208 = vmatmul.mubr.f32.gmra.mrb[0].mxu0 %v195
    %v2209 = vpop.f32.mrb[0].mxu0
    %v2210 = vadd.f32 %v57, %v2209
    %v2211 = vpop.f32.mrb[0].mxu0
    %2212 = vmatprep.mubr.f32.mxu0 0.0
    %2213 = vmatmul.mubr.f32.gmra.mrb[0].mxu0 %v198
    %v2214 = vpop.f32.mrb[0].mxu0
    %v2215 = vadd.f32 %v58, %v2214
    %v2216 = vpop.f32.mrb[0].mxu0
    %2217 = vmatprep.mubr.f32.mxu0 0.0
    %2218 = vmatmul.mubr.f32.gmra.mrb[0].mxu0 %v201
    %v2219 = vpop.f32.mrb[0].mxu0
    %v2220 = vadd.f32 %v59, %v2219
    %v2221 = vpop.f32.mrb[0].mxu0
    %2222 = vmatprep.mubr.f32.mxu0 0.0
    %2223 = vmatmul.mubr.f32.gmra.mrb[0].mxu0 %v204
    %v2224 = vpop.f32.mrb[0].mxu0
    %v2225 = vadd.f32 %v60, %v2224
    %v2226 = vpop.f32.mrb[0].mxu0
    %2227 = vmatprep.mubr.f32.mxu0 0.0
    %2228 = vmatmul.mubr.f32.gmra.mrb[0].mxu0 %v207
    %v2229 = vpop.f32.mrb[0].mxu0
    %v2230 = vadd.f32 %v61, %v2229
    %v2231 = vpop.f32.mrb[0].mxu0
    %2232 = vmatprep.mubr.f32.mxu0 0.0
    %2233 = vmatmul.mubr.f32.gmra.mrb[0].mxu0 %v210
    %v2234 = vpop.f32.mrb[0].mxu0
    %v2235 = vadd.f32 %v62, %v2234
    %v2236 = vpop.f32.mrb[0].mxu0
    %2237 = vmatprep.mubr.f32.mxu0 0.0
    %2238 = vmatmul.mubr.f32.gmra.mrb[0].mxu0 %v213
    %v2239 = vpop.f32.mrb[0].mxu0
    %v2240 = vadd.f32 %v63, %v2239
    %v2241 = vpop.f32.mrb[0].mxu0
    %2242 = vdwg.mxu0
    %2243 = vrot.lane.b32.xlu0 %v2019, 1
    %v2244 = vpop.permute.xlu0 %2243
    %2245 = vrot.lane.b32.xlu0 %v2021, 1
    %v2246 = vpop.permute.xlu0 %2245
    %2247 = vrot.lane.b32.xlu0 %v2023, 1
    %v2248 = vpop.permute.xlu0 %2247
    %2249 = vrot.lane.b32.xlu0 %v2025, 1
    %v2250 = vpop.permute.xlu0 %2249
    %2251 = vrot.lane.b32.xlu0 %v2027, 1
    %v2252 = vpop.permute.xlu0 %2251
    %2253 = vrot.lane.b32.xlu0 %v2029, 1
    %v2254 = vpop.permute.xlu0 %2253
    %2255 = vrot.lane.b32.xlu0 %v2031, 1
    %v2256 = vpop.permute.xlu0 %2255
    %2257 = vrot.lane.b32.xlu0 %v2033, 1
    %v2258 = vpop.permute.xlu0 %2257
    %2259 = vrot.lane.b32.xlu0 %v2020, 1
    %v2260 = vpop.permute.xlu0 %2259
    %2261 = vrot.lane.b32.xlu0 %v2022, 1
    %v2262 = vpop.permute.xlu0 %2261
    %2263 = vrot.lane.b32.xlu0 %v2024, 1
    %v2264 = vpop.permute.xlu0 %2263
    %2265 = vrot.lane.b32.xlu0 %v2026, 1
    %v2266 = vpop.permute.xlu0 %2265
    %2267 = vrot.lane.b32.xlu0 %v2028, 1
    %v2268 = vpop.permute.xlu0 %2267
    %2269 = vrot.lane.b32.xlu0 %v2030, 1
    %v2270 = vpop.permute.xlu0 %2269
    %2271 = vrot.lane.b32.xlu0 %v2032, 1
    %v2272 = vpop.permute.xlu0 %2271
    %2273 = vrot.lane.b32.xlu0 %v2034, 1
    %v2274 = vpop.permute.xlu0 %2273
    %v2275 = vsel %vm354, %v2244, %v2260
    %v2276 = vsel %vm354, %v2246, %v2262
    %v2277 = vsel %vm354, %v2248, %v2264
    %v2278 = vsel %vm354, %v2250, %v2266
    %v2279 = vsel %vm354, %v2252, %v2268
    %v2280 = vsel %vm354, %v2254, %v2270
    %v2281 = vsel %vm354, %v2256, %v2272
    %v2282 = vsel %vm354, %v2258, %v2274
    %v2283 = vsel %vm354, %v2260, %v2244
    %v2284 = vsel %vm354, %v2262, %v2246
    %v2285 = vsel %vm354, %v2264, %v2248
    %v2286 = vsel %vm354, %v2266, %v2250
    %v2287 = vsel %vm354, %v2268, %v2252
    %v2288 = vsel %vm354, %v2270, %v2254
    %v2289 = vsel %vm354, %v2272, %v2256
    %v2290 = vsel %vm354, %v2274, %v2258
    %v2291 = vsel %vm373, %v2283, 0.0
    %v2292 = vsel %vm374, %v2275, 0.0
    %v2293 = vsel %vm373, %v2284, 0.0
    %v2294 = vsel %vm374, %v2276, 0.0
    %v2295 = vsel %vm373, %v2285, 0.0
    %v2296 = vsel %vm374, %v2277, 0.0
    %v2297 = vsel %vm373, %v2286, 0.0
    %v2298 = vsel %vm374, %v2278, 0.0
    %v2299 = vsel %vm373, %v2287, 0.0
    %v2300 = vsel %vm374, %v2279, 0.0
    %v2301 = vsel %vm373, %v2288, 0.0
    %v2302 = vsel %vm374, %v2280, 0.0
    %v2303 = vsel %vm373, %v2289, 0.0
    %v2304 = vsel %vm374, %v2281, 0.0
    %v2305 = vsel %vm373, %v2290, 0.0
    %v2306 = vsel %vm374, %v2282, 0.0
    %2307 = vrot.lane.b32.xlu0 %v2019, 127
    %v2308 = vpop.permute.xlu0 %2307
    %2309 = vrot.lane.b32.xlu0 %v2021, 127
    %v2310 = vpop.permute.xlu0 %2309
    %2311 = vrot.lane.b32.xlu0 %v2023, 127
    %v2312 = vpop.permute.xlu0 %2311
    %2313 = vrot.lane.b32.xlu0 %v2025, 127
    %v2314 = vpop.permute.xlu0 %2313
    %2315 = vrot.lane.b32.xlu0 %v2027, 127
    %v2316 = vpop.permute.xlu0 %2315
    %2317 = vrot.lane.b32.xlu0 %v2029, 127
    %v2318 = vpop.permute.xlu0 %2317
    %2319 = vrot.lane.b32.xlu0 %v2031, 127
    %v2320 = vpop.permute.xlu0 %2319
    %2321 = vrot.lane.b32.xlu0 %v2033, 127
    %v2322 = vpop.permute.xlu0 %2321
    %2323 = vrot.lane.b32.xlu0 %v2020, 127
    %v2324 = vpop.permute.xlu0 %2323
    %2325 = vrot.lane.b32.xlu0 %v2022, 127
    %v2326 = vpop.permute.xlu0 %2325
    %2327 = vrot.lane.b32.xlu0 %v2024, 127
    %v2328 = vpop.permute.xlu0 %2327
    %2329 = vrot.lane.b32.xlu0 %v2026, 127
    %v2330 = vpop.permute.xlu0 %2329
    %2331 = vrot.lane.b32.xlu0 %v2028, 127
    %v2332 = vpop.permute.xlu0 %2331
    %2333 = vrot.lane.b32.xlu0 %v2030, 127
    %v2334 = vpop.permute.xlu0 %2333
    %2335 = vrot.lane.b32.xlu0 %v2032, 127
    %v2336 = vpop.permute.xlu0 %2335
    %2337 = vrot.lane.b32.xlu0 %v2034, 127
    %v2338 = vpop.permute.xlu0 %2337
    %v2339 = vsel %vm425, %v2308, %v2324
    %v2340 = vsel %vm425, %v2310, %v2326
    %v2341 = vsel %vm425, %v2312, %v2328
    %v2342 = vsel %vm425, %v2314, %v2330
    %v2343 = vsel %vm425, %v2316, %v2332
    %v2344 = vsel %vm425, %v2318, %v2334
    %v2345 = vsel %vm425, %v2320, %v2336
    %v2346 = vsel %vm425, %v2322, %v2338
    %v2347 = vsel %vm425, %v2324, %v2308
    %v2348 = vsel %vm425, %v2326, %v2310
    %v2349 = vsel %vm425, %v2328, %v2312
    %v2350 = vsel %vm425, %v2330, %v2314
    %v2351 = vsel %vm425, %v2332, %v2316
    %v2352 = vsel %vm425, %v2334, %v2318
    %v2353 = vsel %vm425, %v2336, %v2320
    %v2354 = vsel %vm425, %v2338, %v2322
    %v2355 = vsel %vm444, %v2339, 0.0
    %v2356 = vsel %vm445, %v2347, 0.0
    %v2357 = vsel %vm444, %v2340, 0.0
    %v2358 = vsel %vm445, %v2348, 0.0
    %v2359 = vsel %vm444, %v2341, 0.0
    %v2360 = vsel %vm445, %v2349, 0.0
    %v2361 = vsel %vm444, %v2342, 0.0
    %v2362 = vsel %vm445, %v2350, 0.0
    %v2363 = vsel %vm444, %v2343, 0.0
    %v2364 = vsel %vm445, %v2351, 0.0
    %v2365 = vsel %vm444, %v2344, 0.0
    %v2366 = vsel %vm445, %v2352, 0.0
    %v2367 = vsel %vm444, %v2345, 0.0
    %v2368 = vsel %vm445, %v2353, 0.0
    %v2369 = vsel %vm444, %v2346, 0.0
    %v2370 = vsel %vm445, %v2354, 0.0
    %v2371 = vmul.f32 %v465, %v2291
    %v2372 = vmul.f32 %v465, %v2292
    %v2373 = vmul.f32 %v470, %v2293
    %v2374 = vmul.f32 %v470, %v2294
    %v2375 = vmul.f32 %v475, %v2295
    %v2376 = vmul.f32 %v475, %v2296
    %v2377 = vmul.f32 %v480, %v2297
    %v2378 = vmul.f32 %v480, %v2298
    %v2379 = vmul.f32 %v485, %v2299
    %v2380 = vmul.f32 %v485, %v2300
    %v2381 = vmul.f32 %v490, %v2301
    %v2382 = vmul.f32 %v490, %v2302
    %v2383 = vmul.f32 %v495, %v2303
    %v2384 = vmul.f32 %v495, %v2304
    %v2385 = vmul.f32 %v500, %v2305
    %v2386 = vmul.f32 %v500, %v2306
    %v2387 = vmul.f32 %v520, %v2019
    %v2388 = vmul.f32 %v520, %v2020
    %v2389 = vmul.f32 %v524, %v2021
    %v2390 = vmul.f32 %v524, %v2022
    %v2391 = vmul.f32 %v528, %v2023
    %v2392 = vmul.f32 %v528, %v2024
    %v2393 = vmul.f32 %v532, %v2025
    %v2394 = vmul.f32 %v532, %v2026
    %v2395 = vmul.f32 %v536, %v2027
    %v2396 = vmul.f32 %v536, %v2028
    %v2397 = vmul.f32 %v540, %v2029
    %v2398 = vmul.f32 %v540, %v2030
    %v2399 = vmul.f32 %v544, %v2031
    %v2400 = vmul.f32 %v544, %v2032
    %v2401 = vmul.f32 %v548, %v2033
    %v2402 = vmul.f32 %v548, %v2034
    %v2403 = vadd.f32 %v2371, %v2387
    %v2404 = vadd.f32 %v2372, %v2388
    %v2405 = vadd.f32 %v2373, %v2389
    %v2406 = vadd.f32 %v2374, %v2390
    %v2407 = vadd.f32 %v2375, %v2391
    %v2408 = vadd.f32 %v2376, %v2392
    %v2409 = vadd.f32 %v2377, %v2393
    %v2410 = vadd.f32 %v2378, %v2394
    %v2411 = vadd.f32 %v2379, %v2395
    %v2412 = vadd.f32 %v2380, %v2396
    %v2413 = vadd.f32 %v2381, %v2397
    %v2414 = vadd.f32 %v2382, %v2398
    %v2415 = vadd.f32 %v2383, %v2399
    %v2416 = vadd.f32 %v2384, %v2400
    %v2417 = vadd.f32 %v2385, %v2401
    %v2418 = vadd.f32 %v2386, %v2402
    %v2419 = vmul.f32 %v584, %v2355
    %v2420 = vmul.f32 %v584, %v2356
    %v2421 = vmul.f32 %v588, %v2357
    %v2422 = vmul.f32 %v588, %v2358
    %v2423 = vmul.f32 %v592, %v2359
    %v2424 = vmul.f32 %v592, %v2360
    %v2425 = vmul.f32 %v596, %v2361
    %v2426 = vmul.f32 %v596, %v2362
    %v2427 = vmul.f32 %v600, %v2363
    %v2428 = vmul.f32 %v600, %v2364
    %v2429 = vmul.f32 %v604, %v2365
    %v2430 = vmul.f32 %v604, %v2366
    %v2431 = vmul.f32 %v608, %v2367
    %v2432 = vmul.f32 %v608, %v2368
    %v2433 = vmul.f32 %v612, %v2369
    %v2434 = vmul.f32 %v612, %v2370
    %v2435 = vadd.f32 %v2403, %v2419
    %v2436 = vadd.f32 %v2404, %v2420
    %v2437 = vadd.f32 %v2405, %v2421
    %v2438 = vadd.f32 %v2406, %v2422
    %v2439 = vadd.f32 %v2407, %v2423
    %v2440 = vadd.f32 %v2408, %v2424
    %v2441 = vadd.f32 %v2409, %v2425
    %v2442 = vadd.f32 %v2410, %v2426
    %v2443 = vadd.f32 %v2411, %v2427
    %v2444 = vadd.f32 %v2412, %v2428
    %v2445 = vadd.f32 %v2413, %v2429
    %v2446 = vadd.f32 %v2414, %v2430
    %v2447 = vadd.f32 %v2415, %v2431
    %v2448 = vadd.f32 %v2416, %v2432
    %v2449 = vadd.f32 %v2417, %v2433
    %v2450 = vadd.f32 %v2418, %v2434
    %2452 = vset.pattern.permute.xlu0 0
    %2453 = vperm.xlu0 %2452, %v2205
    %v2454 = vpop.permute.xlu0 %2453
    %2457 = vset.pattern.permute.xlu0 0
    %2458 = vperm.xlu0 %2457, %v2210
    %v2459 = vpop.permute.xlu0 %2458
    %2462 = vset.pattern.permute.xlu0 0
    %2463 = vperm.xlu0 %2462, %v2215
    %v2464 = vpop.permute.xlu0 %2463
    %2467 = vset.pattern.permute.xlu0 0
    %2468 = vperm.xlu0 %2467, %v2220
    %v2469 = vpop.permute.xlu0 %2468
    %2472 = vset.pattern.permute.xlu0 0
    %2473 = vperm.xlu0 %2472, %v2225
    %v2474 = vpop.permute.xlu0 %2473
    %2477 = vset.pattern.permute.xlu0 0
    %2478 = vperm.xlu0 %2477, %v2230
    %v2479 = vpop.permute.xlu0 %2478
    %2482 = vset.pattern.permute.xlu0 0
    %2483 = vperm.xlu0 %2482, %v2235
    %v2484 = vpop.permute.xlu0 %2483
    %2487 = vset.pattern.permute.xlu0 0
    %2488 = vperm.xlu0 %2487, %v2240
    %v2489 = vpop.permute.xlu0 %2488
    %v2491 = vadd.f32 %v2435, %v2454
    %v2492 = vadd.f32 %v2436, %v2454
    %v2493 = vadd.f32 %v2437, %v2459
    %v2494 = vadd.f32 %v2438, %v2459
    %v2495 = vadd.f32 %v2439, %v2464
    %v2496 = vadd.f32 %v2440, %v2464
    %v2497 = vadd.f32 %v2441, %v2469
    %v2498 = vadd.f32 %v2442, %v2469
    %v2499 = vadd.f32 %v2443, %v2474
    %v2500 = vadd.f32 %v2444, %v2474
    %v2501 = vadd.f32 %v2445, %v2479
    %v2502 = vadd.f32 %v2446, %v2479
    %v2503 = vadd.f32 %v2447, %v2484
    %v2504 = vadd.f32 %v2448, %v2484
    %v2505 = vadd.f32 %v2449, %v2489
    %v2506 = vadd.f32 %v2450, %v2489
    %v2507 = vsub.f32 0.0, %v2491
    %v2508 = vsub.f32 0.0, %v2492
    %v2509 = vsub.f32 0.0, %v2493
    %v2510 = vsub.f32 0.0, %v2494
    %v2511 = vsub.f32 0.0, %v2495
    %v2512 = vsub.f32 0.0, %v2496
    %v2513 = vsub.f32 0.0, %v2497
    %v2514 = vsub.f32 0.0, %v2498
    %v2515 = vsub.f32 0.0, %v2499
    %v2516 = vsub.f32 0.0, %v2500
    %v2517 = vsub.f32 0.0, %v2501
    %v2518 = vsub.f32 0.0, %v2502
    %v2519 = vsub.f32 0.0, %v2503
    %v2520 = vsub.f32 0.0, %v2504
    %v2521 = vsub.f32 0.0, %v2505
    %v2522 = vsub.f32 0.0, %v2506
    %v2523 = vmul.f32 %v2507, 1.442695
    %v2524 = vpow.pop %v2523
    %v2525 = vmul.f32 %v2508, 1.442695
    %v2526 = vpow.pop %v2525
    %v2527 = vmul.f32 %v2509, 1.442695
    %v2528 = vpow.pop %v2527
    %v2529 = vmul.f32 %v2510, 1.442695
    %v2530 = vpow.pop %v2529
    %v2531 = vmul.f32 %v2511, 1.442695
    %v2532 = vpow.pop %v2531
    %v2533 = vmul.f32 %v2512, 1.442695
    %v2534 = vpow.pop %v2533
    %v2535 = vmul.f32 %v2513, 1.442695
    %v2536 = vpow.pop %v2535
    %v2537 = vmul.f32 %v2514, 1.442695
    %v2538 = vpow.pop %v2537
    %v2539 = vmul.f32 %v2515, 1.442695
    %v2540 = vpow.pop %v2539
    %v2541 = vmul.f32 %v2516, 1.442695
    %v2542 = vpow.pop %v2541
    %v2543 = vmul.f32 %v2517, 1.442695
    %v2544 = vpow.pop %v2543
    %v2545 = vmul.f32 %v2518, 1.442695
    %v2546 = vpow.pop %v2545
    %v2547 = vmul.f32 %v2519, 1.442695
    %v2548 = vpow.pop %v2547
    %v2549 = vmul.f32 %v2520, 1.442695
    %v2550 = vpow.pop %v2549
    %v2551 = vmul.f32 %v2521, 1.442695
    %v2552 = vpow.pop %v2551
    %v2553 = vmul.f32 %v2522, 1.442695
    %v2554 = vpow.pop %v2553
    %v2555 = vadd.f32 %v2524, 1.0
    %v2556 = vadd.f32 %v2526, 1.0
    %v2557 = vadd.f32 %v2528, 1.0
    %v2558 = vadd.f32 %v2530, 1.0
    %v2559 = vadd.f32 %v2532, 1.0
    %v2560 = vadd.f32 %v2534, 1.0
    %v2561 = vadd.f32 %v2536, 1.0
    %v2562 = vadd.f32 %v2538, 1.0
    %v2563 = vadd.f32 %v2540, 1.0
    %v2564 = vadd.f32 %v2542, 1.0
    %v2565 = vadd.f32 %v2544, 1.0
    %v2566 = vadd.f32 %v2546, 1.0
    %v2567 = vadd.f32 %v2548, 1.0
    %v2568 = vadd.f32 %v2550, 1.0
    %v2569 = vadd.f32 %v2552, 1.0
    %v2570 = vadd.f32 %v2554, 1.0
    %v2571 = vrcp.pop %v2555
    %v2572 = vrcp.pop %v2556
    %v2573 = vrcp.pop %v2557
    %v2574 = vrcp.pop %v2558
    %v2575 = vrcp.pop %v2559
    %v2576 = vrcp.pop %v2560
    %v2577 = vrcp.pop %v2561
    %v2578 = vrcp.pop %v2562
    %v2579 = vrcp.pop %v2563
    %v2580 = vrcp.pop %v2564
    %v2581 = vrcp.pop %v2565
    %v2582 = vrcp.pop %v2566
    %v2583 = vrcp.pop %v2567
    %v2584 = vrcp.pop %v2568
    %v2585 = vrcp.pop %v2569
    %v2586 = vrcp.pop %v2570
    %v2587 = vmul.f32 %v2019, %v2571
    %v2588 = vmul.f32 %v2020, %v2572
    %v2589 = vmul.f32 %v2021, %v2573
    %v2590 = vmul.f32 %v2022, %v2574
    %v2591 = vmul.f32 %v2023, %v2575
    %v2592 = vmul.f32 %v2024, %v2576
    %v2593 = vmul.f32 %v2025, %v2577
    %v2594 = vmul.f32 %v2026, %v2578
    %v2595 = vmul.f32 %v2027, %v2579
    %v2596 = vmul.f32 %v2028, %v2580
    %v2597 = vmul.f32 %v2029, %v2581
    %v2598 = vmul.f32 %v2030, %v2582
    %v2599 = vmul.f32 %v2031, %v2583
    %v2600 = vmul.f32 %v2032, %v2584
    %v2601 = vmul.f32 %v2033, %v2585
    %v2602 = vmul.f32 %v2034, %v2586
    %s2603 = scalar_lea.vmem [#allocation5], 384
    %2604 = vst [vmem:[%s2603] sm:$0xff] %v2587
    %2605 = vst [vmem:[%s2603 + $0x8] sm:$0xff] %v2588
    %2606 = vst [vmem:[%s2603 + $0x10] sm:$0xff] %v2589
    %2607 = vst [vmem:[%s2603 + $0x18] sm:$0xff] %v2590
    %2608 = vst [vmem:[%s2603 + $0x20] sm:$0xff] %v2591
    %2609 = vst [vmem:[%s2603 + $0x28] sm:$0xff] %v2592
    %2610 = vst [vmem:[%s2603 + $0x30] sm:$0xff] %v2593
    %2611 = vst [vmem:[%s2603 + $0x38] sm:$0xff] %v2594
    %2612 = vst [vmem:[%s2603 + $0x40] sm:$0xff] %v2595
    %2613 = vst [vmem:[%s2603 + $0x48] sm:$0xff] %v2596
    %2614 = vst [vmem:[%s2603 + $0x50] sm:$0xff] %v2597
    %2615 = vst [vmem:[%s2603 + $0x58] sm:$0xff] %v2598
    %2616 = vst [vmem:[%s2603 + $0x60] sm:$0xff] %v2599
    %2617 = vst [vmem:[%s2603 + $0x68] sm:$0xff] %v2600
    %2618 = vst [vmem:[%s2603 + $0x70] sm:$0xff] %v2601
    %2619 = vst [vmem:[%s2603 + $0x78] sm:$0xff] %v2602
    // Predicated region
    $region30: #{tpu_custom_call.1} parent=1 // pred_check
      _
    $region31: #{tpu_custom_call.1} parent=1 // pred_check_branch
      %2621 = sbr.rel (0) target = $region33
    $region32: #{tpu_custom_call.1} parent=1 // pred_region
      %s2623 = ssub.s32 8192, 8192
      %2624 = vsyncadd [#allocation4], %s2623
      %s2625 = sshll.u32 [#allocation5], 4
      %s2626 = int_to_ptr.vmem [resolvable:$true] %s2625
      %2631 = dma.vmem_to_hbm [thread:$0]  %s2626, 8192, %s6, [#allocation4], 256, 256, 16
    $region33: #{tpu_custom_call.1} parent=1 // pred_fallthru
      _
    // Predicated region
    $region34: #{tpu_custom_call.1} parent=1 // pred_check
      _
    $region35: #{tpu_custom_call.1} parent=1 // pred_check_branch
      %2633 = sbr.rel (0) target = $region37
    $region36: #{tpu_custom_call.1} parent=1 // pred_region
      %2634 = dma.done [#allocation4], 8192
    $region37: #{tpu_custom_call.1} parent=1 // pred_fallthru
      _
    %2635 = vsyncpa [#allocation3], 1
    %2636 = vsyncpa [#allocation4], 1

</llo_original>
